<compile_context>
chip_gen: v7x
topology: tpu7x:2x2x1
jax: 0.10.0
libtpu: 0.0.40
codegen_flags: <defaults>
</compile_context>

<pallas_src>
import functools

import jax
import jax.numpy as jnp
import numpy as np
from jax import lax
from jax.experimental import pallas as pl
from jax.experimental.pallas import tpu as pltpu


def _round_up(x, m):
    return (x + m - 1) // m * m


def _down_kernel(xt_ref, w1_ref, s1_ref, b1_ref, w2_ref, s2_ref, b2_ref, o_ref,
                 *, TH, W1, Wp, Hp, Cin, Cmid, Coutp):
    """DoubleConv on one (image, row-tile) grid point.

    xt_ref : (1, TH+4, W1+2, Cin) bf16 -- pooled rows [t*TH-2, t*TH+TH+2) with a zero halo
             of 2 rows / 2+ cols (right side padded up for sublane alignment).
    w1_ref : (9, Cin, Cmid) bf16 ; w2_ref : (9, Cmid, Coutp) bf16   (tap-major 3x3 weights)
    s*/b*  : folded BN(+conv-bias) scale / shift, f32.
    o_ref  : (1, TH, Wp, Coutp) bf16 output tile (lane-dense; channel pad sliced off outside).
    """
    t = pl.program_id(1)
    xt = xt_ref[0]                                           # (TH+4, W1+2, Cin) bf16

    # ---- Conv1 (3x3, pad 1) + BN + ReLU over TH+2 rows x W1 cols (covers conv2's halo) ----
    M1 = (TH + 2) * W1
    acc1 = jnp.zeros((M1, Cmid), jnp.float32)
    for dx in range(3):                                      # dx outer: one shifted slice
        cols = xt[:, dx:dx + W1, :]                          #   shared by the 3 dy taps
        for dy in range(3):
            patch = cols[dy:dy + TH + 2]                     # row slice: leading dim, cheap
            acc1 += jnp.dot(patch.reshape(M1, Cin), w1_ref[dy * 3 + dx],
                            preferred_element_type=jnp.float32)
    h1 = jnp.maximum(acc1 * s1_ref[...] + b1_ref[...], 0.0).reshape(TH + 2, W1, Cmid)

    # Halo rows/cols of h1 that fall outside the image are conv2's zero padding: force them
    # to 0 (ReLU(BN(conv1(zeros))) is generally nonzero).  Also zeroes Hp % TH overrun rows.
    row_g = lax.broadcasted_iota(jnp.int32, (TH + 2, W1, 1), 0) + (t * TH - 1)
    col_g = lax.broadcasted_iota(jnp.int32, (TH + 2, W1, 1), 1) - 1
    valid = (row_g >= 0) & (row_g < Hp) & (col_g >= 0) & (col_g < Wp)
    h1 = jnp.where(valid, h1, 0.0).astype(jnp.bfloat16)

    # ---- Conv2 (3x3, pad 1) + BN + ReLU over the TH x Wp output tile ----
    M2 = TH * Wp
    acc2 = jnp.zeros((M2, Coutp), jnp.float32)
    for dx in range(3):
        cols = h1[:, dx:dx + Wp, :]
        for dy in range(3):
            patch = cols[dy:dy + TH]
            acc2 += jnp.dot(patch.reshape(M2, Cmid), w2_ref[dy * 3 + dx],
                            preferred_element_type=jnp.float32)
    out = jnp.maximum(acc2 * s2_ref[...] + b2_ref[...], 0.0)
    o_ref[0] = out.reshape(TH, Wp, Coutp).astype(o_ref.dtype)


def down_pallas(x_nchw, w1, scale1, shift1, w2, scale2, shift2, *, tile_rows=None,
                vmem_limit_bytes=64 * 1024 * 1024):
    """MaxPool2d(2) -> Conv3x3+BN+ReLU -> Conv3x3+BN+ReLU.  NCHW in, NCHW out (f32)."""
    N, Cin, H, W = x_nchw.shape
    assert H % 2 == 0 and W % 2 == 0, "Down assumes even spatial dims (like nn.MaxPool2d(2))"
    Hp, Wp = H // 2, W // 2
    Cmid = w1.shape[3]
    Cout = w2.shape[3]
    Coutp = _round_up(Cout, 128)            # lane-dense output stores
    W1 = _round_up(Wp + 2, 8)               # conv1 output width: conv2 halo + sublane align
    WpP = W1 + 2                            # padded pooled width

    # ---- row-tile selection: target ~16 MiB of per-step live data, rebalance vs Hp ----
    if tile_rows is None:
        per_row = (WpP * Cin * 2 * 2            # input tile (bf16, double-buffered)
                   + W1 * Cmid * (4 + 2)        # acc1 (f32) + h1 (bf16)
                   + Wp * Coutp * (4 + 2 * 2))  # acc2 (f32) + output tile (bf16, 2 buffers)
        tile_rows = max(8, (16 * 1024 * 1024) // max(per_row, 1))
    TH = int(min(Hp, max(1, int(tile_rows))))
    num_tiles = -(-Hp // TH)
    TH = -(-Hp // num_tiles)                # rebalance: minimize wasted overrun rows
    HpT = num_tiles * TH

    # ---- XLA prep pass: 2x2 max-pool -> NHWC bf16 -> zero halo -> overlapping row tiles ----
    xp = x_nchw.reshape(N, Cin, Hp, 2, Wp, 2).max(axis=(3, 5))
    xp = jnp.transpose(xp, (0, 2, 3, 1)).astype(jnp.bfloat16)            # (N, Hp, Wp, Cin)
    xp = jnp.pad(xp, ((0, 0), (2, HpT - Hp + 2), (2, WpP - Wp - 2), (0, 0)))
    row_idx = jnp.arange(num_tiles)[:, None] * TH + jnp.arange(TH + 4)[None, :]
    xt = xp[:, row_idx]                                                  # (N, T, TH+4, WpP, Cin)
    xt = xt.reshape(N * num_tiles, TH + 4, WpP, Cin)

    # ---- weights: tap-major, bf16; folded BN scale/shift (f32), Cout padded to Coutp ----
    w1r = w1.reshape(9, Cin, Cmid).astype(jnp.bfloat16)
    w2r = jnp.pad(w2.reshape(9, Cmid, Cout),
                  ((0, 0), (0, 0), (0, Coutp - Cout))).astype(jnp.bfloat16)
    s1 = scale1.reshape(1, Cmid).astype(jnp.float32)
    b1 = shift1.reshape(1, Cmid).astype(jnp.float32)
    s2 = jnp.pad(scale2.reshape(1, Cout), ((0, 0), (0, Coutp - Cout))).astype(jnp.float32)
    b2 = jnp.pad(shift2.reshape(1, Cout), ((0, 0), (0, Coutp - Cout))).astype(jnp.float32)

    kernel = functools.partial(_down_kernel, TH=TH, W1=W1, Wp=Wp, Hp=Hp,
                               Cin=Cin, Cmid=Cmid, Coutp=Coutp)

    flops = int(2 * N * HpT * 9 * (W1 * Cin * Cmid + Wp * Cmid * Coutp))
    bytes_accessed = int(xt.size * 2 + w1r.size * 2 + w2r.size * 2
                         + (s1.size + b1.size + s2.size + b2.size) * 4
                         + N * HpT * Wp * Coutp * 2)

    grid_spec = pltpu.PrefetchScalarGridSpec(
        num_scalar_prefetch=0,
        grid=(N, num_tiles),
        in_specs=[
            pl.BlockSpec((1, TH + 4, WpP, Cin),
                         lambda n, t: (n * num_tiles + t, 0, 0, 0)),
            pl.BlockSpec((9, Cin, Cmid), lambda n, t: (0, 0, 0)),
            pl.BlockSpec((1, Cmid), lambda n, t: (0, 0)),
            pl.BlockSpec((1, Cmid), lambda n, t: (0, 0)),
            pl.BlockSpec((9, Cmid, Coutp), lambda n, t: (0, 0, 0)),
            pl.BlockSpec((1, Coutp), lambda n, t: (0, 0)),
            pl.BlockSpec((1, Coutp), lambda n, t: (0, 0)),
        ],
        out_specs=pl.BlockSpec((1, TH, Wp, Coutp), lambda n, t: (n, t, 0, 0)),
    )

    out = pl.pallas_call(
        kernel,
        out_shape=jax.ShapeDtypeStruct((N, HpT, Wp, Coutp), jnp.bfloat16),
        grid_spec=grid_spec,
        compiler_params=pltpu.CompilerParams(
            dimension_semantics=("parallel", "parallel"),
            vmem_limit_bytes=vmem_limit_bytes),
        cost_estimate=pl.CostEstimate(flops=flops, transcendentals=0,
                                      bytes_accessed=bytes_accessed),
    )(xt, w1r, s1, b1, w2r, s2, b2)

    out = out[:, :Hp, :, :Cout]                  # drop row-overrun and channel padding
    out = jnp.transpose(out, (0, 3, 1, 2))       # NHWC -> NCHW
    return out.astype(jnp.float32)               # match the PyTorch module's f32 output


def init_params(key, in_channels, out_channels, eps=1e-5):
    """Deterministic synthetic parameters matching Down(in_channels, out_channels)."""
    mid = out_channels
    ks = jax.random.split(key, 12)
    w1_pt = 0.2 * jax.random.normal(ks[0], (mid, in_channels, 3, 3), jnp.float32)
    b1_pt = 0.1 * jax.random.normal(ks[1], (mid,), jnp.float32)
    g1 = 1.0 + 0.1 * jax.random.normal(ks[2], (mid,), jnp.float32)
    beta1 = 0.1 * jax.random.normal(ks[3], (mid,), jnp.float32)
    m1 = 0.1 * jax.random.normal(ks[4], (mid,), jnp.float32)
    v1 = 1.0 + 0.1 * jnp.abs(jax.random.normal(ks[5], (mid,), jnp.float32))

    w2_pt = 0.2 * jax.random.normal(ks[6], (out_channels, mid, 3, 3), jnp.float32)
    b2_pt = 0.1 * jax.random.normal(ks[7], (out_channels,), jnp.float32)
    g2 = 1.0 + 0.1 * jax.random.normal(ks[8], (out_channels,), jnp.float32)
    beta2 = 0.1 * jax.random.normal(ks[9], (out_channels,), jnp.float32)
    m2 = 0.1 * jax.random.normal(ks[10], (out_channels,), jnp.float32)
    v2 = 1.0 + 0.1 * jnp.abs(jax.random.normal(ks[11], (out_channels,), jnp.float32))

    # Kernel layout HWIO; fold conv bias + eval-mode BN into per-channel scale/shift.
    w1 = jnp.transpose(w1_pt, (2, 3, 1, 0))
    w2 = jnp.transpose(w2_pt, (2, 3, 1, 0))
    scale1 = g1 / jnp.sqrt(v1 + eps)
    shift1 = (b1_pt - m1) * scale1 + beta1
    scale2 = g2 / jnp.sqrt(v2 + eps)
    shift2 = (b2_pt - m2) * scale2 + beta2
    return w1, scale1, shift1, w2, scale2, shift2


def down_reference(x_nchw, w1, scale1, shift1, w2, scale2, shift2):
    """Pure-JAX f32 reference (same math, XLA conv)."""
    N, C, H, W = x_nchw.shape
    xp = x_nchw.reshape(N, C, H // 2, 2, W // 2, 2).max(axis=(3, 5))

    def block(h, w, s, b):
        y = jax.lax.conv_general_dilated(
            h, w, window_strides=(1, 1), padding="SAME",
            dimension_numbers=("NCHW", "HWIO", "NCHW"))
        y = y * s[None, :, None, None] + b[None, :, None, None]
        return jnp.maximum(y, 0.0)

    h = block(xp, w1, scale1, shift1)
    return block(h, w2, scale2, shift2)


if __name__ == "__main__":
    key = jax.random.PRNGKey(0)
    k_x, k_p = jax.random.split(key)

    N, Cin, H, W = 2, 4, 16, 16
    Cout = 8
    x = jax.random.normal(k_x, (N, Cin, H, W), jnp.float32)            # NCHW, like PyTorch

    params = init_params(k_p, Cin, Cout)
    ref = jax.block_until_ready(down_reference(x, *params))

    # Exercise both the multi-row-tile path (recomputed halo + boundary masking) and the
    # auto-picked single-tile path.
    for tr in (4, None):
        out = jax.block_until_ready(down_pallas(x, *params, tile_rows=tr))
        assert out.shape == (N, Cout, H // 2, W // 2), out.shape
        # bf16 matmul inputs / bf16 output (f32 accumulation) -> relaxed tolerance vs f32 ref.
        np.testing.assert_allclose(np.asarray(out), np.asarray(ref), rtol=2e-2, atol=4e-2)

    print("KERNEL_OK")
</pallas_src>

<mosaic_0001>
module attributes {stable_mosaic.version = 11 : i64} {
  func.func @_down_kernel(%arg0: i32, %arg1: i32, %arg2: memref<1x8x18x4xbf16, #tpu.memory_space<vmem>>, %arg3: memref<9x4x8xbf16, #tpu.memory_space<vmem>>, %arg4: memref<1x8xf32, #tpu.memory_space<vmem>>, %arg5: memref<1x8xf32, #tpu.memory_space<vmem>>, %arg6: memref<9x8x128xbf16, #tpu.memory_space<vmem>>, %arg7: memref<1x128xf32, #tpu.memory_space<vmem>>, %arg8: memref<1x128xf32, #tpu.memory_space<vmem>>, %arg9: memref<1x4x8x128xbf16, #tpu.memory_space<vmem>>) attributes {dimension_semantics = [#tpu.dimension_semantics<parallel>, #tpu.dimension_semantics<parallel>], iteration_bounds = array<i64: 2, 2>, scalar_prefetch = 0 : i64, scratch_operands = 0 : i64, tpu.core_type = #tpu.core_type<tc>, window_params = [{transform_indices = @transform_0, window_bounds = array<i64: 1, 8, 18, 4>}, {pipeline_mode = #tpu.pipeline_mode<synchronous>, transform_indices = @transform_1, window_bounds = array<i64: 9, 4, 8>}, {pipeline_mode = #tpu.pipeline_mode<synchronous>, transform_indices = @transform_2, window_bounds = array<i64: 1, 8>}, {pipeline_mode = #tpu.pipeline_mode<synchronous>, transform_indices = @transform_3, window_bounds = array<i64: 1, 8>}, {pipeline_mode = #tpu.pipeline_mode<synchronous>, transform_indices = @transform_4, window_bounds = array<i64: 9, 8, 128>}, {pipeline_mode = #tpu.pipeline_mode<synchronous>, transform_indices = @transform_5, window_bounds = array<i64: 1, 128>}, {pipeline_mode = #tpu.pipeline_mode<synchronous>, transform_indices = @transform_6, window_bounds = array<i64: 1, 128>}, {transform_indices = @transform_7, window_bounds = array<i64: 1, 4, 8, 128>}]} {
    %c0 = arith.constant 0 : index
    %c0_0 = arith.constant 0 : index
    %c0_1 = arith.constant 0 : index
    %c0_2 = arith.constant 0 : index
    %0 = vector.load %arg2[%c0, %c0_0, %c0_1, %c0_2] : memref<1x8x18x4xbf16, #tpu.memory_space<vmem>>, vector<1x8x18x4xbf16>
    %1 = vector.shape_cast %0 : vector<1x8x18x4xbf16> to vector<8x18x4xbf16>
    %cst = arith.constant 0.000000e+00 : f32
    %2 = vector.broadcast %cst : f32 to vector<96x8xf32>
    %3 = vector.extract_strided_slice %1 {offsets = [0, 0, 0], sizes = [8, 16, 4], strides = [1, 1, 1]} : vector<8x18x4xbf16> to vector<8x16x4xbf16>
    %4 = vector.extract_strided_slice %3 {offsets = [0, 0, 0], sizes = [6, 16, 4], strides = [1, 1, 1]} : vector<8x16x4xbf16> to vector<6x16x4xbf16>
    %5 = vector.shape_cast %4 : vector<6x16x4xbf16> to vector<96x4xbf16>
    %c0_3 = arith.constant 0 : index
    %c0_4 = arith.constant 0 : index
    %c0_5 = arith.constant 0 : index
    %6 = vector.load %arg3[%c0_3, %c0_4, %c0_5] : memref<9x4x8xbf16, #tpu.memory_space<vmem>>, vector<1x4x8xbf16>
    %7 = vector.shape_cast %6 : vector<1x4x8xbf16> to vector<4x8xbf16>
    %cst_6 = arith.constant dense<0.000000e+00> : vector<96x8xf32>
    %8 = tpu.matmul %5, %7, %cst_6 {dimension_numbers = #tpu.dot_dimension_numbers<[1], [0], [0], [1], [0, 0, 1, 1], [], []>} : vector<96x4xbf16>, vector<4x8xbf16>, vector<96x8xf32> -> vector<96x8xf32>
    %9 = arith.addf %2, %8 : vector<96x8xf32>
    %10 = vector.extract_strided_slice %3 {offsets = [1, 0, 0], sizes = [6, 16, 4], strides = [1, 1, 1]} : vector<8x16x4xbf16> to vector<6x16x4xbf16>
    %11 = vector.shape_cast %10 : vector<6x16x4xbf16> to vector<96x4xbf16>
    %c3 = arith.constant 3 : index
    %c0_7 = arith.constant 0 : index
    %c0_8 = arith.constant 0 : index
    %12 = vector.load %arg3[%c3, %c0_7, %c0_8] : memref<9x4x8xbf16, #tpu.memory_space<vmem>>, vector<1x4x8xbf16>
    %13 = vector.shape_cast %12 : vector<1x4x8xbf16> to vector<4x8xbf16>
    %cst_9 = arith.constant dense<0.000000e+00> : vector<96x8xf32>
    %14 = tpu.matmul %11, %13, %cst_9 {dimension_numbers = #tpu.dot_dimension_numbers<[1], [0], [0], [1], [0, 0, 1, 1], [], []>} : vector<96x4xbf16>, vector<4x8xbf16>, vector<96x8xf32> -> vector<96x8xf32>
    %15 = arith.addf %9, %14 : vector<96x8xf32>
    %16 = vector.extract_strided_slice %3 {offsets = [2, 0, 0], sizes = [6, 16, 4], strides = [1, 1, 1]} : vector<8x16x4xbf16> to vector<6x16x4xbf16>
    %17 = vector.shape_cast %16 : vector<6x16x4xbf16> to vector<96x4xbf16>
    %c6 = arith.constant 6 : index
    %c0_10 = arith.constant 0 : index
    %c0_11 = arith.constant 0 : index
    %18 = vector.load %arg3[%c6, %c0_10, %c0_11] : memref<9x4x8xbf16, #tpu.memory_space<vmem>>, vector<1x4x8xbf16>
    %19 = vector.shape_cast %18 : vector<1x4x8xbf16> to vector<4x8xbf16>
    %cst_12 = arith.constant dense<0.000000e+00> : vector<96x8xf32>
    %20 = tpu.matmul %17, %19, %cst_12 {dimension_numbers = #tpu.dot_dimension_numbers<[1], [0], [0], [1], [0, 0, 1, 1], [], []>} : vector<96x4xbf16>, vector<4x8xbf16>, vector<96x8xf32> -> vector<96x8xf32>
    %21 = arith.addf %15, %20 : vector<96x8xf32>
    %22 = vector.extract_strided_slice %1 {offsets = [0, 1, 0], sizes = [8, 16, 4], strides = [1, 1, 1]} : vector<8x18x4xbf16> to vector<8x16x4xbf16>
    %23 = vector.extract_strided_slice %22 {offsets = [0, 0, 0], sizes = [6, 16, 4], strides = [1, 1, 1]} : vector<8x16x4xbf16> to vector<6x16x4xbf16>
    %24 = vector.shape_cast %23 : vector<6x16x4xbf16> to vector<96x4xbf16>
    %c1 = arith.constant 1 : index
    %c0_13 = arith.constant 0 : index
    %c0_14 = arith.constant 0 : index
    %25 = vector.load %arg3[%c1, %c0_13, %c0_14] : memref<9x4x8xbf16, #tpu.memory_space<vmem>>, vector<1x4x8xbf16>
    %26 = vector.shape_cast %25 : vector<1x4x8xbf16> to vector<4x8xbf16>
    %cst_15 = arith.constant dense<0.000000e+00> : vector<96x8xf32>
    %27 = tpu.matmul %24, %26, %cst_15 {dimension_numbers = #tpu.dot_dimension_numbers<[1], [0], [0], [1], [0, 0, 1, 1], [], []>} : vector<96x4xbf16>, vector<4x8xbf16>, vector<96x8xf32> -> vector<96x8xf32>
    %28 = arith.addf %21, %27 : vector<96x8xf32>
    %29 = vector.extract_strided_slice %22 {offsets = [1, 0, 0], sizes = [6, 16, 4], strides = [1, 1, 1]} : vector<8x16x4xbf16> to vector<6x16x4xbf16>
    %30 = vector.shape_cast %29 : vector<6x16x4xbf16> to vector<96x4xbf16>
    %c4 = arith.constant 4 : index
    %c0_16 = arith.constant 0 : index
    %c0_17 = arith.constant 0 : index
    %31 = vector.load %arg3[%c4, %c0_16, %c0_17] : memref<9x4x8xbf16, #tpu.memory_space<vmem>>, vector<1x4x8xbf16>
    %32 = vector.shape_cast %31 : vector<1x4x8xbf16> to vector<4x8xbf16>
    %cst_18 = arith.constant dense<0.000000e+00> : vector<96x8xf32>
    %33 = tpu.matmul %30, %32, %cst_18 {dimension_numbers = #tpu.dot_dimension_numbers<[1], [0], [0], [1], [0, 0, 1, 1], [], []>} : vector<96x4xbf16>, vector<4x8xbf16>, vector<96x8xf32> -> vector<96x8xf32>
    %34 = arith.addf %28, %33 : vector<96x8xf32>
    %35 = vector.extract_strided_slice %22 {offsets = [2, 0, 0], sizes = [6, 16, 4], strides = [1, 1, 1]} : vector<8x16x4xbf16> to vector<6x16x4xbf16>
    %36 = vector.shape_cast %35 : vector<6x16x4xbf16> to vector<96x4xbf16>
    %c7 = arith.constant 7 : index
    %c0_19 = arith.constant 0 : index
    %c0_20 = arith.constant 0 : index
    %37 = vector.load %arg3[%c7, %c0_19, %c0_20] : memref<9x4x8xbf16, #tpu.memory_space<vmem>>, vector<1x4x8xbf16>
    %38 = vector.shape_cast %37 : vector<1x4x8xbf16> to vector<4x8xbf16>
    %cst_21 = arith.constant dense<0.000000e+00> : vector<96x8xf32>
    %39 = tpu.matmul %36, %38, %cst_21 {dimension_numbers = #tpu.dot_dimension_numbers<[1], [0], [0], [1], [0, 0, 1, 1], [], []>} : vector<96x4xbf16>, vector<4x8xbf16>, vector<96x8xf32> -> vector<96x8xf32>
    %40 = arith.addf %34, %39 : vector<96x8xf32>
    %41 = vector.extract_strided_slice %1 {offsets = [0, 2, 0], sizes = [8, 16, 4], strides = [1, 1, 1]} : vector<8x18x4xbf16> to vector<8x16x4xbf16>
    %42 = vector.extract_strided_slice %41 {offsets = [0, 0, 0], sizes = [6, 16, 4], strides = [1, 1, 1]} : vector<8x16x4xbf16> to vector<6x16x4xbf16>
    %43 = vector.shape_cast %42 : vector<6x16x4xbf16> to vector<96x4xbf16>
    %c2 = arith.constant 2 : index
    %c0_22 = arith.constant 0 : index
    %c0_23 = arith.constant 0 : index
    %44 = vector.load %arg3[%c2, %c0_22, %c0_23] : memref<9x4x8xbf16, #tpu.memory_space<vmem>>, vector<1x4x8xbf16>
    %45 = vector.shape_cast %44 : vector<1x4x8xbf16> to vector<4x8xbf16>
    %cst_24 = arith.constant dense<0.000000e+00> : vector<96x8xf32>
    %46 = tpu.matmul %43, %45, %cst_24 {dimension_numbers = #tpu.dot_dimension_numbers<[1], [0], [0], [1], [0, 0, 1, 1], [], []>} : vector<96x4xbf16>, vector<4x8xbf16>, vector<96x8xf32> -> vector<96x8xf32>
    %47 = arith.addf %40, %46 : vector<96x8xf32>
    %48 = vector.extract_strided_slice %41 {offsets = [1, 0, 0], sizes = [6, 16, 4], strides = [1, 1, 1]} : vector<8x16x4xbf16> to vector<6x16x4xbf16>
    %49 = vector.shape_cast %48 : vector<6x16x4xbf16> to vector<96x4xbf16>
    %c5 = arith.constant 5 : index
    %c0_25 = arith.constant 0 : index
    %c0_26 = arith.constant 0 : index
    %50 = vector.load %arg3[%c5, %c0_25, %c0_26] : memref<9x4x8xbf16, #tpu.memory_space<vmem>>, vector<1x4x8xbf16>
    %51 = vector.shape_cast %50 : vector<1x4x8xbf16> to vector<4x8xbf16>
    %cst_27 = arith.constant dense<0.000000e+00> : vector<96x8xf32>
    %52 = tpu.matmul %49, %51, %cst_27 {dimension_numbers = #tpu.dot_dimension_numbers<[1], [0], [0], [1], [0, 0, 1, 1], [], []>} : vector<96x4xbf16>, vector<4x8xbf16>, vector<96x8xf32> -> vector<96x8xf32>
    %53 = arith.addf %47, %52 : vector<96x8xf32>
    %54 = vector.extract_strided_slice %41 {offsets = [2, 0, 0], sizes = [6, 16, 4], strides = [1, 1, 1]} : vector<8x16x4xbf16> to vector<6x16x4xbf16>
    %55 = vector.shape_cast %54 : vector<6x16x4xbf16> to vector<96x4xbf16>
    %c8 = arith.constant 8 : index
    %c0_28 = arith.constant 0 : index
    %c0_29 = arith.constant 0 : index
    %56 = vector.load %arg3[%c8, %c0_28, %c0_29] : memref<9x4x8xbf16, #tpu.memory_space<vmem>>, vector<1x4x8xbf16>
    %57 = vector.shape_cast %56 : vector<1x4x8xbf16> to vector<4x8xbf16>
    %cst_30 = arith.constant dense<0.000000e+00> : vector<96x8xf32>
    %58 = tpu.matmul %55, %57, %cst_30 {dimension_numbers = #tpu.dot_dimension_numbers<[1], [0], [0], [1], [0, 0, 1, 1], [], []>} : vector<96x4xbf16>, vector<4x8xbf16>, vector<96x8xf32> -> vector<96x8xf32>
    %59 = arith.addf %53, %58 : vector<96x8xf32>
    %c0_31 = arith.constant 0 : index
    %c0_32 = arith.constant 0 : index
    %60 = vector.load %arg4[%c0_31, %c0_32] : memref<1x8xf32, #tpu.memory_space<vmem>>, vector<1x8xf32>
    %61 = vector.broadcast %60 : vector<1x8xf32> to vector<96x8xf32>
    %62 = arith.mulf %59, %61 : vector<96x8xf32>
    %c0_33 = arith.constant 0 : index
    %c0_34 = arith.constant 0 : index
    %63 = vector.load %arg5[%c0_33, %c0_34] : memref<1x8xf32, #tpu.memory_space<vmem>>, vector<1x8xf32>
    %64 = vector.broadcast %63 : vector<1x8xf32> to vector<96x8xf32>
    %65 = arith.addf %62, %64 : vector<96x8xf32>
    %cst_35 = arith.constant 0.000000e+00 : f32
    %66 = vector.broadcast %cst_35 : f32 to vector<96x8xf32>
    %67 = arith.maximumf %65, %66 : vector<96x8xf32>
    %68 = vector.shape_cast %67 : vector<96x8xf32> to vector<6x16x8xf32>
    %69 = tpu.iota {dimensions = array<i32: 0>} : vector<6x16x1xi32>
    %c4_i32 = arith.constant 4 : i32
    %70 = arith.muli %arg1, %c4_i32 : i32
    %c1_i32 = arith.constant 1 : i32
    %71 = arith.subi %70, %c1_i32 : i32
    %72 = vector.broadcast %71 : i32 to vector<6x16x1xi32>
    %73 = arith.addi %69, %72 : vector<6x16x1xi32>
    %74 = tpu.iota {dimensions = array<i32: 1>} : vector<6x16x1xi32>
    %c1_i32_36 = arith.constant 1 : i32
    %75 = vector.broadcast %c1_i32_36 : i32 to vector<6x16x1xi32>
    %76 = arith.subi %74, %75 : vector<6x16x1xi32>
    %c0_i32 = arith.constant 0 : i32
    %77 = vector.broadcast %c0_i32 : i32 to vector<6x16x1xi32>
    %78 = arith.cmpi sge, %73, %77 : vector<6x16x1xi32>
    %c8_i32 = arith.constant 8 : i32
    %79 = vector.broadcast %c8_i32 : i32 to vector<6x16x1xi32>
    %80 = arith.cmpi slt, %73, %79 : vector<6x16x1xi32>
    %81 = arith.andi %78, %80 : vector<6x16x1xi1>
    %c0_i32_37 = arith.constant 0 : i32
    %82 = vector.broadcast %c0_i32_37 : i32 to vector<6x16x1xi32>
    %83 = arith.cmpi sge, %76, %82 : vector<6x16x1xi32>
    %84 = arith.andi %81, %83 : vector<6x16x1xi1>
    %c8_i32_38 = arith.constant 8 : i32
    %85 = vector.broadcast %c8_i32_38 : i32 to vector<6x16x1xi32>
    %86 = arith.cmpi slt, %76, %85 : vector<6x16x1xi32>
    %87 = arith.andi %84, %86 : vector<6x16x1xi1>
    %cst_39 = arith.constant 0.000000e+00 : f32
    %88 = vector.shape_cast %87 : vector<6x16x1xi1> to vector<6x16x1xi1>
    %89 = vector.broadcast %88 : vector<6x16x1xi1> to vector<6x16x8xi1>
    %90 = vector.broadcast %cst_39 : f32 to vector<6x16x8xf32>
    %91 = arith.select %89, %68, %90 : vector<6x16x8xi1>, vector<6x16x8xf32>
    %92 = arith.truncf %91 : vector<6x16x8xf32> to vector<6x16x8xbf16>
    %cst_40 = arith.constant 0.000000e+00 : f32
    %93 = vector.broadcast %cst_40 : f32 to vector<32x128xf32>
    %94 = vector.extract_strided_slice %92 {offsets = [0, 0, 0], sizes = [6, 8, 8], strides = [1, 1, 1]} : vector<6x16x8xbf16> to vector<6x8x8xbf16>
    %95 = vector.extract_strided_slice %94 {offsets = [0, 0, 0], sizes = [4, 8, 8], strides = [1, 1, 1]} : vector<6x8x8xbf16> to vector<4x8x8xbf16>
    %96 = vector.shape_cast %95 : vector<4x8x8xbf16> to vector<32x8xbf16>
    %c0_41 = arith.constant 0 : index
    %c0_42 = arith.constant 0 : index
    %c0_43 = arith.constant 0 : index
    %97 = vector.load %arg6[%c0_41, %c0_42, %c0_43] : memref<9x8x128xbf16, #tpu.memory_space<vmem>>, vector<1x8x128xbf16>
    %98 = vector.shape_cast %97 : vector<1x8x128xbf16> to vector<8x128xbf16>
    %cst_44 = arith.constant dense<0.000000e+00> : vector<32x128xf32>
    %99 = tpu.matmul %96, %98, %cst_44 {dimension_numbers = #tpu.dot_dimension_numbers<[1], [0], [0], [1], [0, 0, 1, 1], [], []>} : vector<32x8xbf16>, vector<8x128xbf16>, vector<32x128xf32> -> vector<32x128xf32>
    %100 = arith.addf %93, %99 : vector<32x128xf32>
    %101 = vector.extract_strided_slice %94 {offsets = [1, 0, 0], sizes = [4, 8, 8], strides = [1, 1, 1]} : vector<6x8x8xbf16> to vector<4x8x8xbf16>
    %102 = vector.shape_cast %101 : vector<4x8x8xbf16> to vector<32x8xbf16>
    %c3_45 = arith.constant 3 : index
    %c0_46 = arith.constant 0 : index
    %c0_47 = arith.constant 0 : index
    %103 = vector.load %arg6[%c3_45, %c0_46, %c0_47] : memref<9x8x128xbf16, #tpu.memory_space<vmem>>, vector<1x8x128xbf16>
    %104 = vector.shape_cast %103 : vector<1x8x128xbf16> to vector<8x128xbf16>
    %cst_48 = arith.constant dense<0.000000e+00> : vector<32x128xf32>
    %105 = tpu.matmul %102, %104, %cst_48 {dimension_numbers = #tpu.dot_dimension_numbers<[1], [0], [0], [1], [0, 0, 1, 1], [], []>} : vector<32x8xbf16>, vector<8x128xbf16>, vector<32x128xf32> -> vector<32x128xf32>
    %106 = arith.addf %100, %105 : vector<32x128xf32>
    %107 = vector.extract_strided_slice %94 {offsets = [2, 0, 0], sizes = [4, 8, 8], strides = [1, 1, 1]} : vector<6x8x8xbf16> to vector<4x8x8xbf16>
    %108 = vector.shape_cast %107 : vector<4x8x8xbf16> to vector<32x8xbf16>
    %c6_49 = arith.constant 6 : index
    %c0_50 = arith.constant 0 : index
    %c0_51 = arith.constant 0 : index
    %109 = vector.load %arg6[%c6_49, %c0_50, %c0_51] : memref<9x8x128xbf16, #tpu.memory_space<vmem>>, vector<1x8x128xbf16>
    %110 = vector.shape_cast %109 : vector<1x8x128xbf16> to vector<8x128xbf16>
    %cst_52 = arith.constant dense<0.000000e+00> : vector<32x128xf32>
    %111 = tpu.matmul %108, %110, %cst_52 {dimension_numbers = #tpu.dot_dimension_numbers<[1], [0], [0], [1], [0, 0, 1, 1], [], []>} : vector<32x8xbf16>, vector<8x128xbf16>, vector<32x128xf32> -> vector<32x128xf32>
    %112 = arith.addf %106, %111 : vector<32x128xf32>
    %113 = vector.extract_strided_slice %92 {offsets = [0, 1, 0], sizes = [6, 8, 8], strides = [1, 1, 1]} : vector<6x16x8xbf16> to vector<6x8x8xbf16>
    %114 = vector.extract_strided_slice %113 {offsets = [0, 0, 0], sizes = [4, 8, 8], strides = [1, 1, 1]} : vector<6x8x8xbf16> to vector<4x8x8xbf16>
    %115 = vector.shape_cast %114 : vector<4x8x8xbf16> to vector<32x8xbf16>
    %c1_53 = arith.constant 1 : index
    %c0_54 = arith.constant 0 : index
    %c0_55 = arith.constant 0 : index
    %116 = vector.load %arg6[%c1_53, %c0_54, %c0_55] : memref<9x8x128xbf16, #tpu.memory_space<vmem>>, vector<1x8x128xbf16>
    %117 = vector.shape_cast %116 : vector<1x8x128xbf16> to vector<8x128xbf16>
    %cst_56 = arith.constant dense<0.000000e+00> : vector<32x128xf32>
    %118 = tpu.matmul %115, %117, %cst_56 {dimension_numbers = #tpu.dot_dimension_numbers<[1], [0], [0], [1], [0, 0, 1, 1], [], []>} : vector<32x8xbf16>, vector<8x128xbf16>, vector<32x128xf32> -> vector<32x128xf32>
    %119 = arith.addf %112, %118 : vector<32x128xf32>
    %120 = vector.extract_strided_slice %113 {offsets = [1, 0, 0], sizes = [4, 8, 8], strides = [1, 1, 1]} : vector<6x8x8xbf16> to vector<4x8x8xbf16>
    %121 = vector.shape_cast %120 : vector<4x8x8xbf16> to vector<32x8xbf16>
    %c4_57 = arith.constant 4 : index
    %c0_58 = arith.constant 0 : index
    %c0_59 = arith.constant 0 : index
    %122 = vector.load %arg6[%c4_57, %c0_58, %c0_59] : memref<9x8x128xbf16, #tpu.memory_space<vmem>>, vector<1x8x128xbf16>
    %123 = vector.shape_cast %122 : vector<1x8x128xbf16> to vector<8x128xbf16>
    %cst_60 = arith.constant dense<0.000000e+00> : vector<32x128xf32>
    %124 = tpu.matmul %121, %123, %cst_60 {dimension_numbers = #tpu.dot_dimension_numbers<[1], [0], [0], [1], [0, 0, 1, 1], [], []>} : vector<32x8xbf16>, vector<8x128xbf16>, vector<32x128xf32> -> vector<32x128xf32>
    %125 = arith.addf %119, %124 : vector<32x128xf32>
    %126 = vector.extract_strided_slice %113 {offsets = [2, 0, 0], sizes = [4, 8, 8], strides = [1, 1, 1]} : vector<6x8x8xbf16> to vector<4x8x8xbf16>
    %127 = vector.shape_cast %126 : vector<4x8x8xbf16> to vector<32x8xbf16>
    %c7_61 = arith.constant 7 : index
    %c0_62 = arith.constant 0 : index
    %c0_63 = arith.constant 0 : index
    %128 = vector.load %arg6[%c7_61, %c0_62, %c0_63] : memref<9x8x128xbf16, #tpu.memory_space<vmem>>, vector<1x8x128xbf16>
    %129 = vector.shape_cast %128 : vector<1x8x128xbf16> to vector<8x128xbf16>
    %cst_64 = arith.constant dense<0.000000e+00> : vector<32x128xf32>
    %130 = tpu.matmul %127, %129, %cst_64 {dimension_numbers = #tpu.dot_dimension_numbers<[1], [0], [0], [1], [0, 0, 1, 1], [], []>} : vector<32x8xbf16>, vector<8x128xbf16>, vector<32x128xf32> -> vector<32x128xf32>
    %131 = arith.addf %125, %130 : vector<32x128xf32>
    %132 = vector.extract_strided_slice %92 {offsets = [0, 2, 0], sizes = [6, 8, 8], strides = [1, 1, 1]} : vector<6x16x8xbf16> to vector<6x8x8xbf16>
    %133 = vector.extract_strided_slice %132 {offsets = [0, 0, 0], sizes = [4, 8, 8], strides = [1, 1, 1]} : vector<6x8x8xbf16> to vector<4x8x8xbf16>
    %134 = vector.shape_cast %133 : vector<4x8x8xbf16> to vector<32x8xbf16>
    %c2_65 = arith.constant 2 : index
    %c0_66 = arith.constant 0 : index
    %c0_67 = arith.constant 0 : index
    %135 = vector.load %arg6[%c2_65, %c0_66, %c0_67] : memref<9x8x128xbf16, #tpu.memory_space<vmem>>, vector<1x8x128xbf16>
    %136 = vector.shape_cast %135 : vector<1x8x128xbf16> to vector<8x128xbf16>
    %cst_68 = arith.constant dense<0.000000e+00> : vector<32x128xf32>
    %137 = tpu.matmul %134, %136, %cst_68 {dimension_numbers = #tpu.dot_dimension_numbers<[1], [0], [0], [1], [0, 0, 1, 1], [], []>} : vector<32x8xbf16>, vector<8x128xbf16>, vector<32x128xf32> -> vector<32x128xf32>
    %138 = arith.addf %131, %137 : vector<32x128xf32>
    %139 = vector.extract_strided_slice %132 {offsets = [1, 0, 0], sizes = [4, 8, 8], strides = [1, 1, 1]} : vector<6x8x8xbf16> to vector<4x8x8xbf16>
    %140 = vector.shape_cast %139 : vector<4x8x8xbf16> to vector<32x8xbf16>
    %c5_69 = arith.constant 5 : index
    %c0_70 = arith.constant 0 : index
    %c0_71 = arith.constant 0 : index
    %141 = vector.load %arg6[%c5_69, %c0_70, %c0_71] : memref<9x8x128xbf16, #tpu.memory_space<vmem>>, vector<1x8x128xbf16>
    %142 = vector.shape_cast %141 : vector<1x8x128xbf16> to vector<8x128xbf16>
    %cst_72 = arith.constant dense<0.000000e+00> : vector<32x128xf32>
    %143 = tpu.matmul %140, %142, %cst_72 {dimension_numbers = #tpu.dot_dimension_numbers<[1], [0], [0], [1], [0, 0, 1, 1], [], []>} : vector<32x8xbf16>, vector<8x128xbf16>, vector<32x128xf32> -> vector<32x128xf32>
    %144 = arith.addf %138, %143 : vector<32x128xf32>
    %145 = vector.extract_strided_slice %132 {offsets = [2, 0, 0], sizes = [4, 8, 8], strides = [1, 1, 1]} : vector<6x8x8xbf16> to vector<4x8x8xbf16>
    %146 = vector.shape_cast %145 : vector<4x8x8xbf16> to vector<32x8xbf16>
    %c8_73 = arith.constant 8 : index
    %c0_74 = arith.constant 0 : index
    %c0_75 = arith.constant 0 : index
    %147 = vector.load %arg6[%c8_73, %c0_74, %c0_75] : memref<9x8x128xbf16, #tpu.memory_space<vmem>>, vector<1x8x128xbf16>
    %148 = vector.shape_cast %147 : vector<1x8x128xbf16> to vector<8x128xbf16>
    %cst_76 = arith.constant dense<0.000000e+00> : vector<32x128xf32>
    %149 = tpu.matmul %146, %148, %cst_76 {dimension_numbers = #tpu.dot_dimension_numbers<[1], [0], [0], [1], [0, 0, 1, 1], [], []>} : vector<32x8xbf16>, vector<8x128xbf16>, vector<32x128xf32> -> vector<32x128xf32>
    %150 = arith.addf %144, %149 : vector<32x128xf32>
    %c0_77 = arith.constant 0 : index
    %c0_78 = arith.constant 0 : index
    %151 = vector.load %arg7[%c0_77, %c0_78] : memref<1x128xf32, #tpu.memory_space<vmem>>, vector<1x128xf32>
    %152 = vector.broadcast %151 : vector<1x128xf32> to vector<32x128xf32>
    %153 = arith.mulf %150, %152 : vector<32x128xf32>
    %c0_79 = arith.constant 0 : index
    %c0_80 = arith.constant 0 : index
    %154 = vector.load %arg8[%c0_79, %c0_80] : memref<1x128xf32, #tpu.memory_space<vmem>>, vector<1x128xf32>
    %155 = vector.broadcast %154 : vector<1x128xf32> to vector<32x128xf32>
    %156 = arith.addf %153, %155 : vector<32x128xf32>
    %cst_81 = arith.constant 0.000000e+00 : f32
    %157 = vector.broadcast %cst_81 : f32 to vector<32x128xf32>
    %158 = arith.maximumf %156, %157 : vector<32x128xf32>
    %159 = vector.shape_cast %158 : vector<32x128xf32> to vector<4x8x128xf32>
    %160 = arith.truncf %159 : vector<4x8x128xf32> to vector<4x8x128xbf16>
    %c0_82 = arith.constant 0 : index
    %c0_83 = arith.constant 0 : index
    %c0_84 = arith.constant 0 : index
    %c0_85 = arith.constant 0 : index
    %161 = vector.load %arg9[%c0_82, %c0_83, %c0_84, %c0_85] : memref<1x4x8x128xbf16, #tpu.memory_space<vmem>>, vector<1x4x8x128xbf16>
    %162 = vector.shape_cast %161 : vector<1x4x8x128xbf16> to vector<4x8x128xbf16>
    %163 = vector.shape_cast %160 : vector<4x8x128xbf16> to vector<1x4x8x128xbf16>
    tpu.vector_store %arg9[%c0_82, %c0_83, %c0_84, %c0_85], %163 {strides = array<i32>} : memref<1x4x8x128xbf16, #tpu.memory_space<vmem>>, vector<1x4x8x128xbf16>,
    return
  }
  func.func @transform_0(%arg0: i32, %arg1: i32) -> (i32, i32, i32, i32) {
    %c2_i32 = arith.constant 2 : i32
    %0 = arith.muli %arg0, %c2_i32 : i32
    %1 = arith.addi %0, %arg1 : i32
    %c0_i32 = arith.constant 0 : i32
    %c0_i32_0 = arith.constant 0 : i32
    %c0_i32_1 = arith.constant 0 : i32
    %c0_i32_2 = arith.constant 0 : i32
    return %1, %c0_i32, %c0_i32_0, %c0_i32_1 : i32, i32, i32, i32
  }
  func.func @transform_1(%arg0: i32, %arg1: i32) -> (i32, i32, i32) {
    %c0_i32 = arith.constant 0 : i32
    %c0_i32_0 = arith.constant 0 : i32
    %c0_i32_1 = arith.constant 0 : i32
    %c0_i32_2 = arith.constant 0 : i32
    return %c0_i32, %c0_i32_0, %c0_i32_1 : i32, i32, i32
  }
  func.func @transform_2(%arg0: i32, %arg1: i32) -> (i32, i32) {
    %c0_i32 = arith.constant 0 : i32
    %c0_i32_0 = arith.constant 0 : i32
    %c0_i32_1 = arith.constant 0 : i32
    return %c0_i32, %c0_i32_0 : i32, i32
  }
  func.func @transform_3(%arg0: i32, %arg1: i32) -> (i32, i32) {
    %c0_i32 = arith.constant 0 : i32
    %c0_i32_0 = arith.constant 0 : i32
    %c0_i32_1 = arith.constant 0 : i32
    return %c0_i32, %c0_i32_0 : i32, i32
  }
  func.func @transform_4(%arg0: i32, %arg1: i32) -> (i32, i32, i32) {
    %c0_i32 = arith.constant 0 : i32
    %c0_i32_0 = arith.constant 0 : i32
    %c0_i32_1 = arith.constant 0 : i32
    %c0_i32_2 = arith.constant 0 : i32
    return %c0_i32, %c0_i32_0, %c0_i32_1 : i32, i32, i32
  }
  func.func @transform_5(%arg0: i32, %arg1: i32) -> (i32, i32) {
    %c0_i32 = arith.constant 0 : i32
    %c0_i32_0 = arith.constant 0 : i32
    %c0_i32_1 = arith.constant 0 : i32
    return %c0_i32, %c0_i32_0 : i32, i32
  }
  func.func @transform_6(%arg0: i32, %arg1: i32) -> (i32, i32) {
    %c0_i32 = arith.constant 0 : i32
    %c0_i32_0 = arith.constant 0 : i32
    %c0_i32_1 = arith.constant 0 : i32
    return %c0_i32, %c0_i32_0 : i32, i32
  }
  func.func @transform_7(%arg0: i32, %arg1: i32) -> (i32, i32, i32, i32) {
    %c0_i32 = arith.constant 0 : i32
    %c0_i32_0 = arith.constant 0 : i32
    %c0_i32_1 = arith.constant 0 : i32
    return %arg0, %arg1, %c0_i32, %c0_i32_0 : i32, i32, i32, i32
  }
}

</mosaic_0001>

<llo_original>
// kernel: tpu_custom_call.1
$region0: #{tpu_custom_call.1}
  #allocation0 [shape = 'u32[]', space=smem, size = 0x4, offset = 0x4, fixed_abs, tag = 'smem constant byte address 0x4 - core index']
  #allocation1 [shape = 'u32[144,128]{1,0:T(1,128)}', space=vmem, size = 0x12000, scoped, tag = 'internal scratch']
  %s0 = inlined_call_operand.hbm [shape: bf16[4,8,18,4], index: 0, kind: input, shape index: {}]
  %s1 = inlined_call_operand.hbm [shape: bf16[9,4,8], index: 1, kind: input, shape index: {}]
  %s2 = inlined_call_operand.hbm [shape: f32[1,8], index: 2, kind: input, shape index: {}]
  %s3 = inlined_call_operand.hbm [shape: f32[1,8], index: 3, kind: input, shape index: {}]
  %s4 = inlined_call_operand.hbm [shape: bf16[9,8,128], index: 4, kind: input, shape index: {}]
  %s5 = inlined_call_operand.hbm [shape: f32[1,128], index: 5, kind: input, shape index: {}]
  %s6 = inlined_call_operand.hbm [shape: f32[1,128], index: 6, kind: input, shape index: {}]
  %s7 = inlined_call_operand.hbm [shape: bf16[2,8,8,128], index: 7, kind: output, shape index: {}]
  %s8 = sld [smem:[#allocation0]]
  $region89: #{tpu_custom_call.1} parent=0
    _
  %s10 = ssub.s32 1, %s8
  %s11 = scalar_select 0, %s10, %s8
  $region1: #{tpu_custom_call.1} parent=0
    #allocation2 [shape = 'u8[98304]{0}', space=vmem, size = 0x18000, scoped, tag = 'input window, operand 0']
    #allocation3 [shape = 's32[2]{0}', space=sflag, size = 0x8, scoped, tag = 'scoped memory for tpu_custom_call.1']
    #allocation4 [shape = 's32[2]{0}', space=sflag, size = 0x8, scoped, tag = 'scoped memory for tpu_custom_call.1']
    #allocation5 [shape = 'u8[9216]{0}', space=vmem, size = 0x2400, scoped, tag = 'input window, operand 1, single buffered']
    #allocation6 [shape = 's32[1]{0}', space=sflag, size = 0x4, scoped, tag = 'scoped memory for tpu_custom_call.1']
    #allocation7 [shape = 'u8[512]{0}', space=vmem, size = 0x400, scoped, tag = 'input window, operand 2, single buffered']
    #allocation8 [shape = 'u8[512]{0}', space=vmem, size = 0x400, scoped, tag = 'input window, operand 3, single buffered']
    #allocation9 [shape = 's32[1]{0}', space=sflag, size = 0x4, scoped, tag = 'scoped memory for tpu_custom_call.1']
    #allocation10 [shape = 'u8[18432]{0}', space=vmem, size = 0x4800, scoped, tag = 'input window, operand 4, single buffered']
    #allocation11 [shape = 'u8[512]{0}', space=vmem, size = 0x400, scoped, tag = 'input window, operand 5, single buffered']
    #allocation12 [shape = 's32[1]{0}', space=sflag, size = 0x4, scoped, tag = 'scoped memory for tpu_custom_call.1']
    #allocation13 [shape = 'u8[512]{0}', space=vmem, size = 0x400, scoped, tag = 'input window, operand 6, single buffered']
    #allocation14 [shape = 'u8[16384]{0}', space=vmem, size = 0x4000, scoped, tag = 'output window, operand 0']
    %12 = vsyncpa [#allocation3], 0
    %s13 = scalar_lea.sflag [#allocation3], 1
    %14 = vsyncpa %s13, 0
    %15 = vsyncpa [#allocation6], 0
    %16 = vsyncpa [#allocation9], 0
    %17 = vsyncpa [#allocation12], 0
    %18 = vsyncpa [#allocation4], 0
    %s19 = scalar_lea.sflag [#allocation4], 1
    %20 = vsyncpa %s19, 0
    loop: start=0, step=1, limit=6
    $region2: #{tpu_custom_call.1} parent=1 // loop_pre_header
      _
    $region3: #{tpu_custom_call.1} parent=1 // loop_header
      %s22 = sphi 0, %s26
      %p23 = scmp.ge.s32.totalorder %s22, 6
      %s29 = sphi 0, %s41
      %s30 = sphi 0, %s37
      %s31 = sphi 0, %s29
      %s32 = sphi 0, %s30
      %s33 = sphi 0, %s31
      %s34 = sphi 0, %s32
      %s48 = sphi 0, %s50
      %s51 = sphi 0, %s48
      %s52 = sphi 0, %s51
      %s68 = sphi 0, %s52
      %s72 = sphi 0, %s72
      %s74 = sphi 0, %s72
      %s75 = sphi 0, %s74
      %s89 = sphi 0, %s75
      %s93 = sphi 0, %s93
      %s95 = sphi 0, %s93
      %s96 = sphi 0, %s95
      %s110 = sphi 0, %s96
      %s114 = sphi 0, %s114
      %s116 = sphi 0, %s114
      %s117 = sphi 0, %s116
      %s131 = sphi 0, %s117
      %s135 = sphi 0, %s135
      %s137 = sphi 0, %s135
      %s138 = sphi 0, %s137
      %s152 = sphi 0, %s138
      %s156 = sphi 0, %s156
      %s158 = sphi 0, %s156
      %s159 = sphi 0, %s158
      %s173 = sphi 0, %s159
      %s177 = sphi 0, %s177
      %s179 = sphi 0, %s177
      %s180 = sphi 0, %s179
      %s194 = sphi 0, %s180
      %s202 = sphi 0, %s204
      %s205 = sphi 0, %s202
      %s206 = sphi 0, %s205
      %s222 = sphi 0, %s206
    $region4: #{tpu_custom_call.1} parent=1 // loop_header_branch
      %25 = sbr.rel (%p23) target = $region8
    $region5: #{tpu_custom_call.1} parent=1 // loop_body
      %s27 = ssub.s32 %s22, 1
      %s28 = ssub.s32 %s22, 2
      %s35 = sadd.s32 1, %s30
      %p36 = scmp.ge.s32.totalorder %s35, 2
      %s37 = scalar_select %p36, 0, %s35
      %s38 = sadd.s32 1, %s29
      %s39 = scalar_select %p36, %s38, %s29
      %p40 = scmp.ge.s32.totalorder %s39, 2
      %s41 = scalar_select %p40, 0, %s39
      %s42 = smul.u32 %s29, 2
      %s43 = sadd.s32 %s42, %s30
      %s44 = smul.u32 %s41, 2
      %s45 = sadd.s32 %s44, %s37
      %s46 = ssub.s32 %s43, %s45
      %p47 = scmp.eq.s32.totalorder %s46, 0
      %s49 = sadd.s32 %s48, 1
      %s50 = scalar_select %p47, %s48, %s49
      %p53 = pneg %p47
      %p54 = scmp.eq.s32.totalorder %s22, 3
      %p55 = por %p53, %p54
      %p56 = scmp.ne.s32.totalorder %s48, %s51
      %p57 = scmp.eq.s32.totalorder %s22, 0
      %p58 = por %p56, %p57
      %p59 = scmp.ne.s32.totalorder %s48, %s51
      %p60 = scmp.eq.s32.totalorder %s27, 3
      %p61 = por %p59, %p60
      %p62 = scmp.ne.s32.totalorder %s51, %s52
      %p63 = scmp.eq.s32.totalorder %s27, 0
      %p64 = por %p62, %p63
      %p65 = scmp.ne.s32.totalorder %s51, %s52
      %p66 = scmp.eq.s32.totalorder %s28, 3
      %p67 = por %p65, %p66
      %p69 = scmp.ne.s32.totalorder %s52, %s68
      %p70 = scmp.eq.s32.totalorder %s28, 0
      %p71 = por %p69, %p70
      %s73 = sadd.s32 %s72, 1
      %p76 = scmp.eq.s32.totalorder %s22, 3
      %p77 = scmp.ne.s32.totalorder %s72, %s74
      %p78 = scmp.eq.s32.totalorder %s22, 0
      %p79 = por %p77, %p78
      %p80 = scmp.ne.s32.totalorder %s72, %s74
      %p81 = scmp.eq.s32.totalorder %s27, 3
      %p82 = por %p80, %p81
      %p83 = scmp.ne.s32.totalorder %s74, %s75
      %p84 = scmp.eq.s32.totalorder %s27, 0
      %p85 = por %p83, %p84
      %p86 = scmp.ne.s32.totalorder %s74, %s75
      %p87 = scmp.eq.s32.totalorder %s28, 3
      %p88 = por %p86, %p87
      %p90 = scmp.ne.s32.totalorder %s75, %s89
      %p91 = scmp.eq.s32.totalorder %s28, 0
      %p92 = por %p90, %p91
      %s94 = sadd.s32 %s93, 1
      %p97 = scmp.eq.s32.totalorder %s22, 3
      %p98 = scmp.ne.s32.totalorder %s93, %s95
      %p99 = scmp.eq.s32.totalorder %s22, 0
      %p100 = por %p98, %p99
      %p101 = scmp.ne.s32.totalorder %s93, %s95
      %p102 = scmp.eq.s32.totalorder %s27, 3
      %p103 = por %p101, %p102
      %p104 = scmp.ne.s32.totalorder %s95, %s96
      %p105 = scmp.eq.s32.totalorder %s27, 0
      %p106 = por %p104, %p105
      %p107 = scmp.ne.s32.totalorder %s95, %s96
      %p108 = scmp.eq.s32.totalorder %s28, 3
      %p109 = por %p107, %p108
      %p111 = scmp.ne.s32.totalorder %s96, %s110
      %p112 = scmp.eq.s32.totalorder %s28, 0
      %p113 = por %p111, %p112
      %s115 = sadd.s32 %s114, 1
      %p118 = scmp.eq.s32.totalorder %s22, 3
      %p119 = scmp.ne.s32.totalorder %s114, %s116
      %p120 = scmp.eq.s32.totalorder %s22, 0
      %p121 = por %p119, %p120
      %p122 = scmp.ne.s32.totalorder %s114, %s116
      %p123 = scmp.eq.s32.totalorder %s27, 3
      %p124 = por %p122, %p123
      %p125 = scmp.ne.s32.totalorder %s116, %s117
      %p126 = scmp.eq.s32.totalorder %s27, 0
      %p127 = por %p125, %p126
      %p128 = scmp.ne.s32.totalorder %s116, %s117
      %p129 = scmp.eq.s32.totalorder %s28, 3
      %p130 = por %p128, %p129
      %p132 = scmp.ne.s32.totalorder %s117, %s131
      %p133 = scmp.eq.s32.totalorder %s28, 0
      %p134 = por %p132, %p133
      %s136 = sadd.s32 %s135, 1
      %p139 = scmp.eq.s32.totalorder %s22, 3
      %p140 = scmp.ne.s32.totalorder %s135, %s137
      %p141 = scmp.eq.s32.totalorder %s22, 0
      %p142 = por %p140, %p141
      %p143 = scmp.ne.s32.totalorder %s135, %s137
      %p144 = scmp.eq.s32.totalorder %s27, 3
      %p145 = por %p143, %p144
      %p146 = scmp.ne.s32.totalorder %s137, %s138
      %p147 = scmp.eq.s32.totalorder %s27, 0
      %p148 = por %p146, %p147
      %p149 = scmp.ne.s32.totalorder %s137, %s138
      %p150 = scmp.eq.s32.totalorder %s28, 3
      %p151 = por %p149, %p150
      %p153 = scmp.ne.s32.totalorder %s138, %s152
      %p154 = scmp.eq.s32.totalorder %s28, 0
      %p155 = por %p153, %p154
      %s157 = sadd.s32 %s156, 1
      %p160 = scmp.eq.s32.totalorder %s22, 3
      %p161 = scmp.ne.s32.totalorder %s156, %s158
      %p162 = scmp.eq.s32.totalorder %s22, 0
      %p163 = por %p161, %p162
      %p164 = scmp.ne.s32.totalorder %s156, %s158
      %p165 = scmp.eq.s32.totalorder %s27, 3
      %p166 = por %p164, %p165
      %p167 = scmp.ne.s32.totalorder %s158, %s159
      %p168 = scmp.eq.s32.totalorder %s27, 0
      %p169 = por %p167, %p168
      %p170 = scmp.ne.s32.totalorder %s158, %s159
      %p171 = scmp.eq.s32.totalorder %s28, 3
      %p172 = por %p170, %p171
      %p174 = scmp.ne.s32.totalorder %s159, %s173
      %p175 = scmp.eq.s32.totalorder %s28, 0
      %p176 = por %p174, %p175
      %s178 = sadd.s32 %s177, 1
      %p181 = scmp.eq.s32.totalorder %s22, 3
      %p182 = scmp.ne.s32.totalorder %s177, %s179
      %p183 = scmp.eq.s32.totalorder %s22, 0
      %p184 = por %p182, %p183
      %p185 = scmp.ne.s32.totalorder %s177, %s179
      %p186 = scmp.eq.s32.totalorder %s27, 3
      %p187 = por %p185, %p186
      %p188 = scmp.ne.s32.totalorder %s179, %s180
      %p189 = scmp.eq.s32.totalorder %s27, 0
      %p190 = por %p188, %p189
      %p191 = scmp.ne.s32.totalorder %s179, %s180
      %p192 = scmp.eq.s32.totalorder %s28, 3
      %p193 = por %p191, %p192
      %p195 = scmp.ne.s32.totalorder %s180, %s194
      %p196 = scmp.eq.s32.totalorder %s28, 0
      %p197 = por %p195, %p196
      %s198 = ssub.s32 %s29, %s41
      %s199 = ssub.s32 %s30, %s37
      %s200 = sor.u32 %s198, %s199
      %p201 = scmp.eq.s32.totalorder %s200, 0
      %s203 = sadd.s32 %s202, 1
      %s204 = scalar_select %p201, %s202, %s203
      %p207 = pneg %p201
      %p208 = scmp.eq.s32.totalorder %s22, 3
      %p209 = por %p207, %p208
      %p210 = scmp.ne.s32.totalorder %s202, %s205
      %p211 = scmp.eq.s32.totalorder %s22, 0
      %p212 = por %p210, %p211
      %p213 = scmp.ne.s32.totalorder %s202, %s205
      %p214 = scmp.eq.s32.totalorder %s27, 3
      %p215 = por %p213, %p214
      %p216 = scmp.ne.s32.totalorder %s205, %s206
      %p217 = scmp.eq.s32.totalorder %s27, 0
      %p218 = por %p216, %p217
      %p219 = scmp.ne.s32.totalorder %s205, %s206
      %p220 = scmp.eq.s32.totalorder %s28, 3
      %p221 = por %p219, %p220
      %p223 = scmp.ne.s32.totalorder %s206, %s222
      %p224 = scmp.eq.s32.totalorder %s28, 0
      %p225 = por %p223, %p224
      %p226 = scmp.le.s32.totalorder 1, %s22
      %p227 = scmp.lt.s32.totalorder %s22, 5
      %p228 = pnand %p226, %p227
      %p229 = pneg %p228
      // Predicated region
      $region9: #{tpu_custom_call.1} parent=5 // pred_check
        _
      $region10: #{tpu_custom_call.1} parent=5 // pred_check_branch
        %231 = sbr.rel (%p228) target = $region12
      $region11: #{tpu_custom_call.1} parent=5 // pred_region
        %s232 = ssub.s32 %s22, 1
        // Predicated region
        $region13: #{tpu_custom_call.1} parent=11 // pred_check
          %p233 = pneg %p85
        $region14: #{tpu_custom_call.1} parent=11 // pred_check_branch
          %235 = sbr.rel (%p233) target = $region16
        $region15: #{tpu_custom_call.1} parent=11 // pred_region
          %s237 = ssub.s32 288, 288
          %238 = vsyncadd [#allocation6], %s237
          %s239 = sshll.u32 [#allocation5], 4
          %s240 = int_to_ptr.vmem [resolvable:$true] %s239
          %245 = dma.hbm_to_vmem [thread:$0]  %s1, 288, %s240, [#allocation6], 32, 32, 2
        $region16: #{tpu_custom_call.1} parent=11 // pred_fallthru
          _
        // Predicated region
        $region17: #{tpu_custom_call.1} parent=11 // pred_check
          %p246 = pneg %p106
        $region18: #{tpu_custom_call.1} parent=11 // pred_check_branch
          %248 = sbr.rel (%p246) target = $region20
        $region19: #{tpu_custom_call.1} parent=11 // pred_region
          %s250 = ssub.s32 16, 16
          %251 = vsyncadd [#allocation6], %s250
          %s253 = sshll.u32 [#allocation7], 4
          %s254 = int_to_ptr.vmem [resolvable:$true] %s253
          %256 = dma.hbm_to_vmem [thread:$0]  %s2, 16, %s254, [#allocation6]
        $region20: #{tpu_custom_call.1} parent=11 // pred_fallthru
          _
        // Predicated region
        $region21: #{tpu_custom_call.1} parent=11 // pred_check
          %p257 = pneg %p127
        $region22: #{tpu_custom_call.1} parent=11 // pred_check_branch
          %259 = sbr.rel (%p257) target = $region24
        $region23: #{tpu_custom_call.1} parent=11 // pred_region
          %s261 = ssub.s32 16, 16
          %262 = vsyncadd [#allocation9], %s261
          %s264 = sshll.u32 [#allocation8], 4
          %s265 = int_to_ptr.vmem [resolvable:$true] %s264
          %267 = dma.hbm_to_vmem [thread:$0]  %s3, 16, %s265, [#allocation9]
        $region24: #{tpu_custom_call.1} parent=11 // pred_fallthru
          _
        // Predicated region
        $region25: #{tpu_custom_call.1} parent=11 // pred_check
          %p268 = pneg %p148
        $region26: #{tpu_custom_call.1} parent=11 // pred_check_branch
          %270 = sbr.rel (%p268) target = $region28
        $region27: #{tpu_custom_call.1} parent=11 // pred_region
          %s272 = ssub.s32 576, 576
          %273 = vsyncadd [#allocation9], %s272
          %s274 = sshll.u32 [#allocation10], 4
          %s275 = int_to_ptr.vmem [resolvable:$true] %s274
          %280 = dma.hbm_to_vmem [thread:$0]  %s4, 576, %s275, [#allocation9], 64, 64, 4
        $region28: #{tpu_custom_call.1} parent=11 // pred_fallthru
          _
        // Predicated region
        $region29: #{tpu_custom_call.1} parent=11 // pred_check
          %p281 = pneg %p169
        $region30: #{tpu_custom_call.1} parent=11 // pred_check_branch
          %283 = sbr.rel (%p281) target = $region32
        $region31: #{tpu_custom_call.1} parent=11 // pred_region
          %s285 = ssub.s32 16, 16
          %286 = vsyncadd [#allocation12], %s285
          %s288 = sshll.u32 [#allocation11], 4
          %s289 = int_to_ptr.vmem [resolvable:$true] %s288
          %291 = dma.hbm_to_vmem [thread:$0]  %s5, 16, %s289, [#allocation12]
        $region32: #{tpu_custom_call.1} parent=11 // pred_fallthru
          _
        // Predicated region
        $region33: #{tpu_custom_call.1} parent=11 // pred_check
          %p292 = pneg %p190
        $region34: #{tpu_custom_call.1} parent=11 // pred_check_branch
          %294 = sbr.rel (%p292) target = $region36
        $region35: #{tpu_custom_call.1} parent=11 // pred_region
          %s296 = ssub.s32 16, 16
          %297 = vsyncadd [#allocation12], %s296
          %s299 = sshll.u32 [#allocation13], 4
          %s300 = int_to_ptr.vmem [resolvable:$true] %s299
          %302 = dma.hbm_to_vmem [thread:$0]  %s6, 16, %s300, [#allocation12]
        $region36: #{tpu_custom_call.1} parent=11 // pred_fallthru
          _
      $region12: #{tpu_custom_call.1} parent=5 // pred_fallthru
        _
      %p303 = scmp.lt.s32.totalorder %s22, 4
      // Predicated region
      $region37: #{tpu_custom_call.1} parent=5 // pred_check
        %p304 = pneg %p303
      $region38: #{tpu_custom_call.1} parent=5 // pred_check_branch
        %306 = sbr.rel (%p304) target = $region40
      $region39: #{tpu_custom_call.1} parent=5 // pred_region
        // Predicated region
        $region41: #{tpu_custom_call.1} parent=39 // pred_check
          %p307 = pneg %p58
        $region42: #{tpu_custom_call.1} parent=39 // pred_check_branch
          %309 = sbr.rel (%p307) target = $region44
        $region43: #{tpu_custom_call.1} parent=39 // pred_region
          %s310 = sand.u32 %s48, 1
          %s311 = scalar_lea.sflag [#allocation3], %s310
          %s312 = sand.u32 %s48, 1
          %s313 = smul.addr %s312, 96
          %s314 = scalar_lea.vmem [#allocation2], %s313
          %s315 = smul.u32 %s29, 2
          %s316 = sadd.s32 %s315, %s30
          %s318 = ssub.s32 1536, 1536
          %319 = vsyncadd %s311, %s318
          %s320 = smul.addr %s316, 24
          %s321 = smul.addr %s320, 64
          %s322 = scalar_lea.hbm %s0, %s321
          %s323 = sshll.u32 %s314, 4
          %s324 = int_to_ptr.vmem [resolvable:$true] %s323
          %329 = dma.hbm_to_vmem [thread:$0]  %s322, 1536, %s324, %s311, 64, 64, 4
        $region44: #{tpu_custom_call.1} parent=39 // pred_fallthru
          _
      $region40: #{tpu_custom_call.1} parent=5 // pred_fallthru
        _
      %p330 = scmp.le.s32.totalorder 1, %s22
      %p331 = scmp.lt.s32.totalorder %s22, 5
      %p332 = pnand %p330, %p331
      %p333 = pneg %p332
      // Predicated region
      $region45: #{tpu_custom_call.1} parent=5 // pred_check
        _
      $region46: #{tpu_custom_call.1} parent=5 // pred_check_branch
        %335 = sbr.rel (%p332) target = $region48
      $region47: #{tpu_custom_call.1} parent=5 // pred_region
        %s336 = ssub.s32 %s22, 1
        %s337 = sand.u32 %s51, 1
        %s338 = scalar_lea.sflag [#allocation3], %s337
        %s339 = sand.u32 %s51, 1
        %s340 = smul.addr %s339, 96
        %s341 = scalar_lea.vmem [#allocation2], %s340
        // Predicated region
        $region49: #{tpu_custom_call.1} parent=47 // pred_check
          %p342 = pneg %p64
        $region50: #{tpu_custom_call.1} parent=47 // pred_check_branch
          %344 = sbr.rel (%p342) target = $region52
        $region51: #{tpu_custom_call.1} parent=47 // pred_region
          %345 = dma.done %s338, 1536
        $region52: #{tpu_custom_call.1} parent=47 // pred_fallthru
          _
        // Predicated region
        $region53: #{tpu_custom_call.1} parent=47 // pred_check
          %p346 = pneg %p85
        $region54: #{tpu_custom_call.1} parent=47 // pred_check_branch
          %348 = sbr.rel (%p346) target = $region56
        $region55: #{tpu_custom_call.1} parent=47 // pred_region
          %349 = dma.done [#allocation6], 288
        $region56: #{tpu_custom_call.1} parent=47 // pred_fallthru
          _
        // Predicated region
        $region57: #{tpu_custom_call.1} parent=47 // pred_check
          %p350 = pneg %p106
        $region58: #{tpu_custom_call.1} parent=47 // pred_check_branch
          %352 = sbr.rel (%p350) target = $region60
        $region59: #{tpu_custom_call.1} parent=47 // pred_region
          %353 = dma.done [#allocation6], 16
        $region60: #{tpu_custom_call.1} parent=47 // pred_fallthru
          _
        // Predicated region
        $region61: #{tpu_custom_call.1} parent=47 // pred_check
          %p354 = pneg %p127
        $region62: #{tpu_custom_call.1} parent=47 // pred_check_branch
          %356 = sbr.rel (%p354) target = $region64
        $region63: #{tpu_custom_call.1} parent=47 // pred_region
          %357 = dma.done [#allocation9], 16
        $region64: #{tpu_custom_call.1} parent=47 // pred_fallthru
          _
        // Predicated region
        $region65: #{tpu_custom_call.1} parent=47 // pred_check
          %p358 = pneg %p148
        $region66: #{tpu_custom_call.1} parent=47 // pred_check_branch
          %360 = sbr.rel (%p358) target = $region68
        $region67: #{tpu_custom_call.1} parent=47 // pred_region
          %361 = dma.done [#allocation9], 576
        $region68: #{tpu_custom_call.1} parent=47 // pred_fallthru
          _
        // Predicated region
        $region69: #{tpu_custom_call.1} parent=47 // pred_check
          %p362 = pneg %p169
        $region70: #{tpu_custom_call.1} parent=47 // pred_check_branch
          %364 = sbr.rel (%p362) target = $region72
        $region71: #{tpu_custom_call.1} parent=47 // pred_region
          %365 = dma.done [#allocation12], 16
        $region72: #{tpu_custom_call.1} parent=47 // pred_fallthru
          _
        // Predicated region
        $region73: #{tpu_custom_call.1} parent=47 // pred_check
          %p366 = pneg %p190
        $region74: #{tpu_custom_call.1} parent=47 // pred_check_branch
          %368 = sbr.rel (%p366) target = $region76
        $region75: #{tpu_custom_call.1} parent=47 // pred_region
          %369 = dma.done [#allocation12], 16
        $region76: #{tpu_custom_call.1} parent=47 // pred_fallthru
          _
        %s370 = sand.u32 %s51, 1
        %s371 = scalar_lea.sflag [#allocation3], %s370
        %s372 = sand.u32 %s51, 1
        %s373 = smul.addr %s372, 96
        %s374 = scalar_lea.vmem [#allocation2], %s373
        %p375 = pneg %p64
        %p376 = pneg %p61
        %p377 = pneg %p85
        %p378 = pneg %p82
        %p379 = pneg %p106
        %p380 = pneg %p103
        %p381 = pneg %p127
        %p382 = pneg %p124
        %p383 = pneg %p148
        %p384 = pneg %p145
        %p385 = pneg %p169
        %p386 = pneg %p166
        %p387 = pneg %p190
        %p388 = pneg %p187
        %p389 = pneg %p218
        %p390 = pneg %p215
        %s391 = sand.u32 %s205, 1
        %s392 = scalar_lea.sflag [#allocation4], %s391
        %s393 = sand.u32 %s205, 1
        %s394 = smul.addr %s393, 16
        %s395 = scalar_lea.vmem [#allocation14], %s394
        %s396 = smul.u32 %s31, 2
        %s397 = sadd.s32 %s396, %s32
        %s398 = smul.u32 4, %s32
        %v400 = vld [vmem:[%s341] sm:$0xf]
        %v401 = vld [vmem:[%s341 + $0x4] sm:$0xf]
        %v402 = vld [vmem:[%s341 + $0x8] sm:$0x1]
        %v403 = vld [vmem:[%s341 + $0xc] sm:$0xf]
        %v404 = vld [vmem:[%s341 + $0x10] sm:$0xf]
        %v405 = vld [vmem:[%s341 + $0x14] sm:$0x1]
        %v406 = vld [vmem:[%s341 + $0x18] sm:$0xf]
        %v407 = vld [vmem:[%s341 + $0x1c] sm:$0xf]
        %v408 = vld [vmem:[%s341 + $0x20] sm:$0x1]
        %v409 = vld [vmem:[%s341 + $0x24] sm:$0xf]
        %v410 = vld [vmem:[%s341 + $0x28] sm:$0xf]
        %v411 = vld [vmem:[%s341 + $0x2c] sm:$0x1]
        %v412 = vld [vmem:[%s341 + $0x30] sm:$0xf]
        %v413 = vld [vmem:[%s341 + $0x34] sm:$0xf]
        %v414 = vld [vmem:[%s341 + $0x38] sm:$0x1]
        %v415 = vld [vmem:[%s341 + $0x3c] sm:$0xf]
        %v416 = vld [vmem:[%s341 + $0x40] sm:$0xf]
        %v417 = vld [vmem:[%s341 + $0x44] sm:$0x1]
        %v418 = vld [vmem:[%s341 + $0x48] sm:$0xf]
        %v419 = vld [vmem:[%s341 + $0x4c] sm:$0xf]
        %v420 = vld [vmem:[%s341 + $0x50] sm:$0x1]
        %v421 = vld [vmem:[%s341 + $0x54] sm:$0xf]
        %v422 = vld [vmem:[%s341 + $0x58] sm:$0xf]
        %v423 = vld [vmem:[%s341 + $0x5c] sm:$0x1]
        %v424 = vld [vmem:[#allocation5] sm:$0x3]
        %s425 = scalar_lea.vmem [#allocation5], 6
        %v426 = vld [vmem:[%s425] sm:$0x3]
        %v439 = vunpack.c.l.b16 %v403
        %v440 = vunpack.c.l.b16 %v404
        %v441 = vunpack.c.l.b16 %v406
        %v442 = vunpack.c.l.b16 %v407
        %v443 = vunpack.c.l.b16 %v409
        %v444 = vunpack.c.l.b16 %v410
        %v445 = vunpack.c.l.b16 %v412
        %v446 = vunpack.c.l.b16 %v413
        %v447 = vunpack.c.l.b16 %v415
        %v448 = vunpack.c.l.b16 %v416
        %v449 = vunpack.c.l.b16 %v418
        %v450 = vunpack.c.l.b16 %v419
        %v451 = vpack.c.b16 %v440, %v439
        %v452 = vpack.c.b16 %v442, %v441
        %v453 = vpack.c.b16 %v444, %v443
        %v454 = vpack.c.b16 %v446, %v445
        %v455 = vpack.c.b16 %v448, %v447
        %v456 = vpack.c.b16 %v450, %v449
        %vm457 = vcmask 31744
        %v459 = vsel %vm457, %v451, 0
        %v462 = vsel %vm457, %v452, 0
        %v465 = vsel %vm457, %v453, 0
        %v468 = vsel %vm457, %v454, 0
        %v471 = vsel %vm457, %v455, 0
        %v474 = vsel %vm457, %v456, 0
        %vm476 = vcmask 1041408
        %v478 = vsel %vm476, %v426, 0
        %480 = vmatprep.subr.bf16.mxu0 0
        %481 = vmatpush1.bf16.msra.mxu0 %v478
        %482 = vmatprep.subr.bf16.mxu0 0
        %483 = vmatpush1.bf16.msra.mxu0 0
        %484 = vmatprep.subr.bf16.mxu0 0
        %485 = vmatpush1.bf16.msra.mxu0 0
        %486 = vmatprep.subr.bf16.mxu0 0
        %487 = vmatpush1.bf16.msra.mxu0 0
        %488 = vmatprep.subr.bf16.mxu0 0
        %489 = vmatpush1.bf16.msra.mxu0 0
        %490 = vmatprep.subr.bf16.mxu0 0
        %491 = vmatpush1.bf16.msra.mxu0 0
        %492 = vmatprep.subr.bf16.mxu0 0
        %493 = vmatpush1.bf16.msra.mxu0 0
        %494 = vmatprep.subr.bf16.mxu0 0
        %495 = vmatpush1.bf16.msra.mxu0 0
        %496 = vmatprep.subr.bf16.mxu0 0
        %497 = vmatpush1.bf16.msra.mxu0 0
        %498 = vmatprep.subr.bf16.mxu0 0
        %499 = vmatpush1.bf16.msra.mxu0 0
        %500 = vmatprep.subr.bf16.mxu0 0
        %501 = vmatpush1.bf16.msra.mxu0 0
        %502 = vmatprep.subr.bf16.mxu0 0
        %503 = vmatpush1.bf16.msra.mxu0 0
        %504 = vmatprep.subr.bf16.mxu0 0
        %505 = vmatpush1.bf16.msra.mxu0 0
        %506 = vmatprep.subr.bf16.mxu0 0
        %507 = vmatpush1.bf16.msra.mxu0 0
        %508 = vmatprep.subr.bf16.mxu0 0
        %509 = vmatpush1.bf16.msra.mxu0 0
        %510 = vmatprep.subr.bf16.mxu0 0
        %511 = vmatpush1.bf16.msra.mxu0 0
        %512 = vmatprep.mubr.bf16.mxu0 0
        %513 = vmatmul.mubr.bf16.gmra.mrb[0].mxu0 %v459
        %v514 = vpop.f32.mrb[0].mxu0
        %v515 = vadd.f32 0.0, %v514
        %v516 = vpop.f32.mrb[0].mxu0
        %v517 = vpop.f32.mrb[0].mxu0
        %v518 = vadd.f32 0.0, %v517
        %v519 = vpop.f32.mrb[0].mxu0
        %520 = vmatprep.mubr.bf16.mxu0 0
        %521 = vmatmul.mubr.bf16.gmra.mrb[0].mxu0 %v462
        %v522 = vpop.f32.mrb[0].mxu0
        %v523 = vadd.f32 0.0, %v522
        %v524 = vpop.f32.mrb[0].mxu0
        %v525 = vpop.f32.mrb[0].mxu0
        %v526 = vadd.f32 0.0, %v525
        %v527 = vpop.f32.mrb[0].mxu0
        %528 = vmatprep.mubr.bf16.mxu0 0
        %529 = vmatmul.mubr.bf16.gmra.mrb[0].mxu0 %v465
        %v530 = vpop.f32.mrb[0].mxu0
        %v531 = vadd.f32 0.0, %v530
        %v532 = vpop.f32.mrb[0].mxu0
        %v533 = vpop.f32.mrb[0].mxu0
        %v534 = vadd.f32 0.0, %v533
        %v535 = vpop.f32.mrb[0].mxu0
        %536 = vmatprep.mubr.bf16.mxu0 0
        %537 = vmatmul.mubr.bf16.gmra.mrb[0].mxu0 %v468
        %v538 = vpop.f32.mrb[0].mxu0
        %v539 = vadd.f32 0.0, %v538
        %v540 = vpop.f32.mrb[0].mxu0
        %v541 = vpop.f32.mrb[0].mxu0
        %v542 = vadd.f32 0.0, %v541
        %v543 = vpop.f32.mrb[0].mxu0
        %544 = vmatprep.mubr.bf16.mxu0 0
        %545 = vmatmul.mubr.bf16.gmra.mrb[0].mxu0 %v471
        %v546 = vpop.f32.mrb[0].mxu0
        %v547 = vadd.f32 0.0, %v546
        %v548 = vpop.f32.mrb[0].mxu0
        %v549 = vpop.f32.mrb[0].mxu0
        %v550 = vadd.f32 0.0, %v549
        %v551 = vpop.f32.mrb[0].mxu0
        %552 = vmatprep.mubr.bf16.mxu0 0
        %553 = vmatmul.mubr.bf16.gmra.mrb[0].mxu0 %v474
        %v554 = vpop.f32.mrb[0].mxu0
        %v555 = vadd.f32 0.0, %v554
        %v556 = vpop.f32.mrb[0].mxu0
        %v557 = vpop.f32.mrb[0].mxu0
        %v558 = vadd.f32 0.0, %v557
        %v559 = vpop.f32.mrb[0].mxu0
        %560 = vdwg.mxu0
        %v563 = vunpack.c.l.b16 %v400
        %v564 = vunpack.c.l.b16 %v401
        %v565 = vpack.c.b16 %v564, %v563
        %v567 = vsel %vm457, %v565, 0
        %v570 = vsel %vm476, %v424, 0
        %572 = vmatprep.subr.bf16.mxu0 0
        %573 = vmatpush1.bf16.msra.mxu0 %v570
        %574 = vmatprep.subr.bf16.mxu0 0
        %575 = vmatpush1.bf16.msra.mxu0 0
        %576 = vmatprep.subr.bf16.mxu0 0
        %577 = vmatpush1.bf16.msra.mxu0 0
        %578 = vmatprep.subr.bf16.mxu0 0
        %579 = vmatpush1.bf16.msra.mxu0 0
        %580 = vmatprep.subr.bf16.mxu0 0
        %581 = vmatpush1.bf16.msra.mxu0 0
        %582 = vmatprep.subr.bf16.mxu0 0
        %583 = vmatpush1.bf16.msra.mxu0 0
        %584 = vmatprep.subr.bf16.mxu0 0
        %585 = vmatpush1.bf16.msra.mxu0 0
        %586 = vmatprep.subr.bf16.mxu0 0
        %587 = vmatpush1.bf16.msra.mxu0 0
        %588 = vmatprep.subr.bf16.mxu0 0
        %589 = vmatpush1.bf16.msra.mxu0 0
        %590 = vmatprep.subr.bf16.mxu0 0
        %591 = vmatpush1.bf16.msra.mxu0 0
        %592 = vmatprep.subr.bf16.mxu0 0
        %593 = vmatpush1.bf16.msra.mxu0 0
        %594 = vmatprep.subr.bf16.mxu0 0
        %595 = vmatpush1.bf16.msra.mxu0 0
        %596 = vmatprep.subr.bf16.mxu0 0
        %597 = vmatpush1.bf16.msra.mxu0 0
        %598 = vmatprep.subr.bf16.mxu0 0
        %599 = vmatpush1.bf16.msra.mxu0 0
        %600 = vmatprep.subr.bf16.mxu0 0
        %601 = vmatpush1.bf16.msra.mxu0 0
        %602 = vmatprep.subr.bf16.mxu0 0
        %603 = vmatpush1.bf16.msra.mxu0 0
        %604 = vmatprep.mubr.bf16.mxu0 0
        %605 = vmatmul.mubr.bf16.gmra.mrb[0].mxu0 %v567
        %v606 = vpop.f32.mrb[0].mxu0
        %v607 = vadd.f32 %v515, %v606
        %v608 = vpop.f32.mrb[0].mxu0
        %v609 = vpop.f32.mrb[0].mxu0
        %v610 = vadd.f32 %v518, %v609
        %v611 = vpop.f32.mrb[0].mxu0
        %612 = vmatprep.mubr.bf16.mxu0 0
        %613 = vmatmul.mubr.bf16.gmra.mrb[0].mxu0 %v459
        %v614 = vpop.f32.mrb[0].mxu0
        %v615 = vadd.f32 %v523, %v614
        %v616 = vpop.f32.mrb[0].mxu0
        %v617 = vpop.f32.mrb[0].mxu0
        %v618 = vadd.f32 %v526, %v617
        %v619 = vpop.f32.mrb[0].mxu0
        %620 = vmatprep.mubr.bf16.mxu0 0
        %621 = vmatmul.mubr.bf16.gmra.mrb[0].mxu0 %v462
        %v622 = vpop.f32.mrb[0].mxu0
        %v623 = vadd.f32 %v531, %v622
        %v624 = vpop.f32.mrb[0].mxu0
        %v625 = vpop.f32.mrb[0].mxu0
        %v626 = vadd.f32 %v534, %v625
        %v627 = vpop.f32.mrb[0].mxu0
        %628 = vmatprep.mubr.bf16.mxu0 0
        %629 = vmatmul.mubr.bf16.gmra.mrb[0].mxu0 %v465
        %v630 = vpop.f32.mrb[0].mxu0
        %v631 = vadd.f32 %v539, %v630
        %v632 = vpop.f32.mrb[0].mxu0
        %v633 = vpop.f32.mrb[0].mxu0
        %v634 = vadd.f32 %v542, %v633
        %v635 = vpop.f32.mrb[0].mxu0
        %636 = vmatprep.mubr.bf16.mxu0 0
        %637 = vmatmul.mubr.bf16.gmra.mrb[0].mxu0 %v468
        %v638 = vpop.f32.mrb[0].mxu0
        %v639 = vadd.f32 %v547, %v638
        %v640 = vpop.f32.mrb[0].mxu0
        %v641 = vpop.f32.mrb[0].mxu0
        %v642 = vadd.f32 %v550, %v641
        %v643 = vpop.f32.mrb[0].mxu0
        %644 = vmatprep.mubr.bf16.mxu0 0
        %645 = vmatmul.mubr.bf16.gmra.mrb[0].mxu0 %v471
        %v646 = vpop.f32.mrb[0].mxu0
        %v647 = vadd.f32 %v555, %v646
        %v648 = vpop.f32.mrb[0].mxu0
        %v649 = vpop.f32.mrb[0].mxu0
        %v650 = vadd.f32 %v558, %v649
        %v651 = vpop.f32.mrb[0].mxu0
        %652 = vdwg.mxu0
        %s653 = scalar_lea.vmem [#allocation5], 12
        %v654 = vld [vmem:[%s653] sm:$0x3]
        %v657 = vunpack.c.l.b16 %v421
        %v658 = vunpack.c.l.b16 %v422
        %v659 = vpack.c.b16 %v658, %v657
        %v661 = vsel %vm457, %v659, 0
        %v664 = vsel %vm476, %v654, 0
        %666 = vmatprep.subr.bf16.mxu0 0
        %667 = vmatpush1.bf16.msra.mxu0 %v664
        %668 = vmatprep.subr.bf16.mxu0 0
        %669 = vmatpush1.bf16.msra.mxu0 0
        %670 = vmatprep.subr.bf16.mxu0 0
        %671 = vmatpush1.bf16.msra.mxu0 0
        %672 = vmatprep.subr.bf16.mxu0 0
        %673 = vmatpush1.bf16.msra.mxu0 0
        %674 = vmatprep.subr.bf16.mxu0 0
        %675 = vmatpush1.bf16.msra.mxu0 0
        %676 = vmatprep.subr.bf16.mxu0 0
        %677 = vmatpush1.bf16.msra.mxu0 0
        %678 = vmatprep.subr.bf16.mxu0 0
        %679 = vmatpush1.bf16.msra.mxu0 0
        %680 = vmatprep.subr.bf16.mxu0 0
        %681 = vmatpush1.bf16.msra.mxu0 0
        %682 = vmatprep.subr.bf16.mxu0 0
        %683 = vmatpush1.bf16.msra.mxu0 0
        %684 = vmatprep.subr.bf16.mxu0 0
        %685 = vmatpush1.bf16.msra.mxu0 0
        %686 = vmatprep.subr.bf16.mxu0 0
        %687 = vmatpush1.bf16.msra.mxu0 0
        %688 = vmatprep.subr.bf16.mxu0 0
        %689 = vmatpush1.bf16.msra.mxu0 0
        %690 = vmatprep.subr.bf16.mxu0 0
        %691 = vmatpush1.bf16.msra.mxu0 0
        %692 = vmatprep.subr.bf16.mxu0 0
        %693 = vmatpush1.bf16.msra.mxu0 0
        %694 = vmatprep.subr.bf16.mxu0 0
        %695 = vmatpush1.bf16.msra.mxu0 0
        %696 = vmatprep.subr.bf16.mxu0 0
        %697 = vmatpush1.bf16.msra.mxu0 0
        %698 = vmatprep.mubr.bf16.mxu0 0
        %699 = vmatmul.mubr.bf16.gmra.mrb[0].mxu0 %v462
        %v700 = vpop.f32.mrb[0].mxu0
        %v701 = vadd.f32 0.0, %v700
        %v702 = vpop.f32.mrb[0].mxu0
        %v703 = vpop.f32.mrb[0].mxu0
        %v704 = vadd.f32 0.0, %v703
        %v705 = vpop.f32.mrb[0].mxu0
        %706 = vmatprep.mubr.bf16.mxu0 0
        %707 = vmatmul.mubr.bf16.gmra.mrb[0].mxu0 %v465
        %v708 = vpop.f32.mrb[0].mxu0
        %v709 = vadd.f32 0.0, %v708
        %v710 = vpop.f32.mrb[0].mxu0
        %v711 = vpop.f32.mrb[0].mxu0
        %v712 = vadd.f32 0.0, %v711
        %v713 = vpop.f32.mrb[0].mxu0
        %714 = vmatprep.mubr.bf16.mxu0 0
        %715 = vmatmul.mubr.bf16.gmra.mrb[0].mxu0 %v468
        %v716 = vpop.f32.mrb[0].mxu0
        %v717 = vadd.f32 0.0, %v716
        %v718 = vpop.f32.mrb[0].mxu0
        %v719 = vpop.f32.mrb[0].mxu0
        %v720 = vadd.f32 0.0, %v719
        %v721 = vpop.f32.mrb[0].mxu0
        %722 = vmatprep.mubr.bf16.mxu0 0
        %723 = vmatmul.mubr.bf16.gmra.mrb[0].mxu0 %v471
        %v724 = vpop.f32.mrb[0].mxu0
        %v725 = vadd.f32 0.0, %v724
        %v726 = vpop.f32.mrb[0].mxu0
        %v727 = vpop.f32.mrb[0].mxu0
        %v728 = vadd.f32 0.0, %v727
        %v729 = vpop.f32.mrb[0].mxu0
        %730 = vmatprep.mubr.bf16.mxu0 0
        %731 = vmatmul.mubr.bf16.gmra.mrb[0].mxu0 %v474
        %v732 = vpop.f32.mrb[0].mxu0
        %v733 = vadd.f32 0.0, %v732
        %v734 = vpop.f32.mrb[0].mxu0
        %v735 = vpop.f32.mrb[0].mxu0
        %v736 = vadd.f32 0.0, %v735
        %v737 = vpop.f32.mrb[0].mxu0
        %738 = vmatprep.mubr.bf16.mxu0 0
        %739 = vmatmul.mubr.bf16.gmra.mrb[0].mxu0 %v661
        %v740 = vpop.f32.mrb[0].mxu0
        %v741 = vadd.f32 0.0, %v740
        %v742 = vpop.f32.mrb[0].mxu0
        %v743 = vpop.f32.mrb[0].mxu0
        %v744 = vadd.f32 0.0, %v743
        %v745 = vpop.f32.mrb[0].mxu0
        %746 = vdwg.mxu0
        %v747 = vadd.f32 %v607, %v701
        %v748 = vadd.f32 %v610, %v704
        %v749 = vadd.f32 %v615, %v709
        %v750 = vadd.f32 %v618, %v712
        %v751 = vadd.f32 %v623, %v717
        %v752 = vadd.f32 %v626, %v720
        %v753 = vadd.f32 %v631, %v725
        %v754 = vadd.f32 %v634, %v728
        %v755 = vadd.f32 %v639, %v733
        %v756 = vadd.f32 %v642, %v736
        %v757 = vadd.f32 %v647, %v741
        %v758 = vadd.f32 %v650, %v744
        %vm759 = vsmask.f32 3328
        %vm760 = vsmask.f32 7440
        %vm761 = vmor %vm759, %vm760
        %v763 = vshrl.u32 %v400, 16
        %v765 = vrot.slane %v763, 4
        %v766 = vshll.u32 %v400, 16
        %v768 = vrot.slane %v766, 5
        %v769 = vor.u32 %v765, %v768
        %v770 = vrot.slane %v769, 4
        %v772 = vshll.u32 %v401, 16
        %v774 = vrot.slane %v772, 5
        %v775 = vsel %vm761, %v770, %v774
        %v776 = vshrl.u32 %v401, 16
        %v778 = vrot.slane %v776, 4
        %v779 = vor.u32 %v778, %v774
        %v780 = vrot.slane %v779, 4
        %v782 = vshll.u32 %v402, 16
        %v784 = vrot.slane %v782, 5
        %v785 = vsel %vm761, %v780, %v784
        %v787 = vshrl.u32 %v403, 16
        %v789 = vrot.slane %v787, 4
        %v790 = vshll.u32 %v403, 16
        %v792 = vrot.slane %v790, 5
        %v793 = vor.u32 %v789, %v792
        %v794 = vrot.slane %v793, 4
        %v796 = vshll.u32 %v404, 16
        %v798 = vrot.slane %v796, 5
        %v799 = vsel %vm761, %v794, %v798
        %v800 = vshrl.u32 %v404, 16
        %v802 = vrot.slane %v800, 4
        %v803 = vor.u32 %v802, %v798
        %v804 = vrot.slane %v803, 4
        %v806 = vshll.u32 %v405, 16
        %v808 = vrot.slane %v806, 5
        %v809 = vsel %vm761, %v804, %v808
        %v811 = vshrl.u32 %v406, 16
        %v813 = vrot.slane %v811, 4
        %v814 = vshll.u32 %v406, 16
        %v816 = vrot.slane %v814, 5
        %v817 = vor.u32 %v813, %v816
        %v818 = vrot.slane %v817, 4
        %v820 = vshll.u32 %v407, 16
        %v822 = vrot.slane %v820, 5
        %v823 = vsel %vm761, %v818, %v822
        %v824 = vshrl.u32 %v407, 16
        %v826 = vrot.slane %v824, 4
        %v827 = vor.u32 %v826, %v822
        %v828 = vrot.slane %v827, 4
        %v830 = vshll.u32 %v408, 16
        %v832 = vrot.slane %v830, 5
        %v833 = vsel %vm761, %v828, %v832
        %v835 = vshrl.u32 %v409, 16
        %v837 = vrot.slane %v835, 4
        %v838 = vshll.u32 %v409, 16
        %v840 = vrot.slane %v838, 5
        %v841 = vor.u32 %v837, %v840
        %v842 = vrot.slane %v841, 4
        %v844 = vshll.u32 %v410, 16
        %v846 = vrot.slane %v844, 5
        %v847 = vsel %vm761, %v842, %v846
        %v848 = vshrl.u32 %v410, 16
        %v850 = vrot.slane %v848, 4
        %v851 = vor.u32 %v850, %v846
        %v852 = vrot.slane %v851, 4
        %v854 = vshll.u32 %v411, 16
        %v856 = vrot.slane %v854, 5
        %v857 = vsel %vm761, %v852, %v856
        %v859 = vshrl.u32 %v412, 16
        %v861 = vrot.slane %v859, 4
        %v862 = vshll.u32 %v412, 16
        %v864 = vrot.slane %v862, 5
        %v865 = vor.u32 %v861, %v864
        %v866 = vrot.slane %v865, 4
        %v868 = vshll.u32 %v413, 16
        %v870 = vrot.slane %v868, 5
        %v871 = vsel %vm761, %v866, %v870
        %v872 = vshrl.u32 %v413, 16
        %v874 = vrot.slane %v872, 4
        %v875 = vor.u32 %v874, %v870
        %v876 = vrot.slane %v875, 4
        %v878 = vshll.u32 %v414, 16
        %v880 = vrot.slane %v878, 5
        %v881 = vsel %vm761, %v876, %v880
        %v883 = vshrl.u32 %v415, 16
        %v885 = vrot.slane %v883, 4
        %v886 = vshll.u32 %v415, 16
        %v888 = vrot.slane %v886, 5
        %v889 = vor.u32 %v885, %v888
        %v890 = vrot.slane %v889, 4
        %v892 = vshll.u32 %v416, 16
        %v894 = vrot.slane %v892, 5
        %v895 = vsel %vm761, %v890, %v894
        %v896 = vshrl.u32 %v416, 16
        %v898 = vrot.slane %v896, 4
        %v899 = vor.u32 %v898, %v894
        %v900 = vrot.slane %v899, 4
        %v902 = vshll.u32 %v417, 16
        %v904 = vrot.slane %v902, 5
        %v905 = vsel %vm761, %v900, %v904
        %s906 = scalar_lea.vmem [#allocation5], 2
        %v907 = vld [vmem:[%s906] sm:$0x3]
        %v908 = vunpack.c.l.b16 %v775
        %v909 = vunpack.c.l.b16 %v785
        %v910 = vunpack.c.l.b16 %v799
        %v911 = vunpack.c.l.b16 %v809
        %v912 = vunpack.c.l.b16 %v823
        %v913 = vunpack.c.l.b16 %v833
        %v914 = vunpack.c.l.b16 %v847
        %v915 = vunpack.c.l.b16 %v857
        %v916 = vunpack.c.l.b16 %v871
        %v917 = vunpack.c.l.b16 %v881
        %v918 = vunpack.c.l.b16 %v895
        %v919 = vunpack.c.l.b16 %v905
        %v920 = vpack.c.b16 %v909, %v908
        %v921 = vpack.c.b16 %v911, %v910
        %v922 = vpack.c.b16 %v913, %v912
        %v923 = vpack.c.b16 %v915, %v914
        %v924 = vpack.c.b16 %v917, %v916
        %v925 = vpack.c.b16 %v919, %v918
        %v927 = vsel %vm457, %v920, 0
        %v930 = vsel %vm457, %v921, 0
        %v933 = vsel %vm457, %v922, 0
        %v936 = vsel %vm457, %v923, 0
        %v939 = vsel %vm457, %v924, 0
        %v942 = vsel %vm457, %v925, 0
        %v945 = vsel %vm476, %v907, 0
        %947 = vmatprep.subr.bf16.mxu0 0
        %948 = vmatpush1.bf16.msra.mxu0 %v945
        %949 = vmatprep.subr.bf16.mxu0 0
        %950 = vmatpush1.bf16.msra.mxu0 0
        %951 = vmatprep.subr.bf16.mxu0 0
        %952 = vmatpush1.bf16.msra.mxu0 0
        %953 = vmatprep.subr.bf16.mxu0 0
        %954 = vmatpush1.bf16.msra.mxu0 0
        %955 = vmatprep.subr.bf16.mxu0 0
        %956 = vmatpush1.bf16.msra.mxu0 0
        %957 = vmatprep.subr.bf16.mxu0 0
        %958 = vmatpush1.bf16.msra.mxu0 0
        %959 = vmatprep.subr.bf16.mxu0 0
        %960 = vmatpush1.bf16.msra.mxu0 0
        %961 = vmatprep.subr.bf16.mxu0 0
        %962 = vmatpush1.bf16.msra.mxu0 0
        %963 = vmatprep.subr.bf16.mxu0 0
        %964 = vmatpush1.bf16.msra.mxu0 0
        %965 = vmatprep.subr.bf16.mxu0 0
        %966 = vmatpush1.bf16.msra.mxu0 0
        %967 = vmatprep.subr.bf16.mxu0 0
        %968 = vmatpush1.bf16.msra.mxu0 0
        %969 = vmatprep.subr.bf16.mxu0 0
        %970 = vmatpush1.bf16.msra.mxu0 0
        %971 = vmatprep.subr.bf16.mxu0 0
        %972 = vmatpush1.bf16.msra.mxu0 0
        %973 = vmatprep.subr.bf16.mxu0 0
        %974 = vmatpush1.bf16.msra.mxu0 0
        %975 = vmatprep.subr.bf16.mxu0 0
        %976 = vmatpush1.bf16.msra.mxu0 0
        %977 = vmatprep.subr.bf16.mxu0 0
        %978 = vmatpush1.bf16.msra.mxu0 0
        %979 = vmatprep.mubr.bf16.mxu0 0
        %980 = vmatmul.mubr.bf16.gmra.mrb[0].mxu0 %v927
        %v981 = vpop.f32.mrb[0].mxu0
        %v982 = vadd.f32 0.0, %v981
        %v983 = vpop.f32.mrb[0].mxu0
        %v984 = vpop.f32.mrb[0].mxu0
        %v985 = vadd.f32 0.0, %v984
        %v986 = vpop.f32.mrb[0].mxu0
        %987 = vmatprep.mubr.bf16.mxu0 0
        %988 = vmatmul.mubr.bf16.gmra.mrb[0].mxu0 %v930
        %v989 = vpop.f32.mrb[0].mxu0
        %v990 = vadd.f32 0.0, %v989
        %v991 = vpop.f32.mrb[0].mxu0
        %v992 = vpop.f32.mrb[0].mxu0
        %v993 = vadd.f32 0.0, %v992
        %v994 = vpop.f32.mrb[0].mxu0
        %995 = vmatprep.mubr.bf16.mxu0 0
        %996 = vmatmul.mubr.bf16.gmra.mrb[0].mxu0 %v933
        %v997 = vpop.f32.mrb[0].mxu0
        %v998 = vadd.f32 0.0, %v997
        %v999 = vpop.f32.mrb[0].mxu0
        %v1000 = vpop.f32.mrb[0].mxu0
        %v1001 = vadd.f32 0.0, %v1000
        %v1002 = vpop.f32.mrb[0].mxu0
        %1003 = vmatprep.mubr.bf16.mxu0 0
        %1004 = vmatmul.mubr.bf16.gmra.mrb[0].mxu0 %v936
        %v1005 = vpop.f32.mrb[0].mxu0
        %v1006 = vadd.f32 0.0, %v1005
        %v1007 = vpop.f32.mrb[0].mxu0
        %v1008 = vpop.f32.mrb[0].mxu0
        %v1009 = vadd.f32 0.0, %v1008
        %v1010 = vpop.f32.mrb[0].mxu0
        %1011 = vmatprep.mubr.bf16.mxu0 0
        %1012 = vmatmul.mubr.bf16.gmra.mrb[0].mxu0 %v939
        %v1013 = vpop.f32.mrb[0].mxu0
        %v1014 = vadd.f32 0.0, %v1013
        %v1015 = vpop.f32.mrb[0].mxu0
        %v1016 = vpop.f32.mrb[0].mxu0
        %v1017 = vadd.f32 0.0, %v1016
        %v1018 = vpop.f32.mrb[0].mxu0
        %1019 = vmatprep.mubr.bf16.mxu0 0
        %1020 = vmatmul.mubr.bf16.gmra.mrb[0].mxu0 %v942
        %v1021 = vpop.f32.mrb[0].mxu0
        %v1022 = vadd.f32 0.0, %v1021
        %v1023 = vpop.f32.mrb[0].mxu0
        %v1024 = vpop.f32.mrb[0].mxu0
        %v1025 = vadd.f32 0.0, %v1024
        %v1026 = vpop.f32.mrb[0].mxu0
        %1027 = vdwg.mxu0
        %v1028 = vadd.f32 %v747, %v982
        %v1029 = vadd.f32 %v748, %v985
        %v1030 = vadd.f32 %v749, %v990
        %v1031 = vadd.f32 %v750, %v993
        %v1032 = vadd.f32 %v751, %v998
        %v1033 = vadd.f32 %v752, %v1001
        %v1034 = vadd.f32 %v753, %v1006
        %v1035 = vadd.f32 %v754, %v1009
        %v1036 = vadd.f32 %v755, %v1014
        %v1037 = vadd.f32 %v756, %v1017
        %v1038 = vadd.f32 %v757, %v1022
        %v1039 = vadd.f32 %v758, %v1025
        %v1041 = vshrl.u32 %v418, 16
        %v1043 = vrot.slane %v1041, 4
        %v1044 = vshll.u32 %v418, 16
        %v1046 = vrot.slane %v1044, 5
        %v1047 = vor.u32 %v1043, %v1046
        %v1048 = vrot.slane %v1047, 4
        %v1050 = vshll.u32 %v419, 16
        %v1052 = vrot.slane %v1050, 5
        %v1053 = vsel %vm761, %v1048, %v1052
        %v1054 = vshrl.u32 %v419, 16
        %v1056 = vrot.slane %v1054, 4
        %v1057 = vor.u32 %v1056, %v1052
        %v1058 = vrot.slane %v1057, 4
        %v1060 = vshll.u32 %v420, 16
        %v1062 = vrot.slane %v1060, 5
        %v1063 = vsel %vm761, %v1058, %v1062
        %s1064 = scalar_lea.vmem [#allocation5], 8
        %v1065 = vld [vmem:[%s1064] sm:$0x3]
        %v1066 = vunpack.c.l.b16 %v1053
        %v1067 = vunpack.c.l.b16 %v1063
        %v1068 = vpack.c.b16 %v1067, %v1066
        %v1070 = vsel %vm457, %v1068, 0
        %v1073 = vsel %vm476, %v1065, 0
        %1075 = vmatprep.subr.bf16.mxu0 0
        %1076 = vmatpush1.bf16.msra.mxu0 %v1073
        %1077 = vmatprep.subr.bf16.mxu0 0
        %1078 = vmatpush1.bf16.msra.mxu0 0
        %1079 = vmatprep.subr.bf16.mxu0 0
        %1080 = vmatpush1.bf16.msra.mxu0 0
        %1081 = vmatprep.subr.bf16.mxu0 0
        %1082 = vmatpush1.bf16.msra.mxu0 0
        %1083 = vmatprep.subr.bf16.mxu0 0
        %1084 = vmatpush1.bf16.msra.mxu0 0
        %1085 = vmatprep.subr.bf16.mxu0 0
        %1086 = vmatpush1.bf16.msra.mxu0 0
        %1087 = vmatprep.subr.bf16.mxu0 0
        %1088 = vmatpush1.bf16.msra.mxu0 0
        %1089 = vmatprep.subr.bf16.mxu0 0
        %1090 = vmatpush1.bf16.msra.mxu0 0
        %1091 = vmatprep.subr.bf16.mxu0 0
        %1092 = vmatpush1.bf16.msra.mxu0 0
        %1093 = vmatprep.subr.bf16.mxu0 0
        %1094 = vmatpush1.bf16.msra.mxu0 0
        %1095 = vmatprep.subr.bf16.mxu0 0
        %1096 = vmatpush1.bf16.msra.mxu0 0
        %1097 = vmatprep.subr.bf16.mxu0 0
        %1098 = vmatpush1.bf16.msra.mxu0 0
        %1099 = vmatprep.subr.bf16.mxu0 0
        %1100 = vmatpush1.bf16.msra.mxu0 0
        %1101 = vmatprep.subr.bf16.mxu0 0
        %1102 = vmatpush1.bf16.msra.mxu0 0
        %1103 = vmatprep.subr.bf16.mxu0 0
        %1104 = vmatpush1.bf16.msra.mxu0 0
        %1105 = vmatprep.subr.bf16.mxu0 0
        %1106 = vmatpush1.bf16.msra.mxu0 0
        %1107 = vmatprep.mubr.bf16.mxu0 0
        %1108 = vmatmul.mubr.bf16.gmra.mrb[0].mxu0 %v930
        %v1109 = vpop.f32.mrb[0].mxu0
        %v1110 = vadd.f32 0.0, %v1109
        %v1111 = vpop.f32.mrb[0].mxu0
        %v1112 = vpop.f32.mrb[0].mxu0
        %v1113 = vadd.f32 0.0, %v1112
        %v1114 = vpop.f32.mrb[0].mxu0
        %1115 = vmatprep.mubr.bf16.mxu0 0
        %1116 = vmatmul.mubr.bf16.gmra.mrb[0].mxu0 %v933
        %v1117 = vpop.f32.mrb[0].mxu0
        %v1118 = vadd.f32 0.0, %v1117
        %v1119 = vpop.f32.mrb[0].mxu0
        %v1120 = vpop.f32.mrb[0].mxu0
        %v1121 = vadd.f32 0.0, %v1120
        %v1122 = vpop.f32.mrb[0].mxu0
        %1123 = vmatprep.mubr.bf16.mxu0 0
        %1124 = vmatmul.mubr.bf16.gmra.mrb[0].mxu0 %v936
        %v1125 = vpop.f32.mrb[0].mxu0
        %v1126 = vadd.f32 0.0, %v1125
        %v1127 = vpop.f32.mrb[0].mxu0
        %v1128 = vpop.f32.mrb[0].mxu0
        %v1129 = vadd.f32 0.0, %v1128
        %v1130 = vpop.f32.mrb[0].mxu0
        %1131 = vmatprep.mubr.bf16.mxu0 0
        %1132 = vmatmul.mubr.bf16.gmra.mrb[0].mxu0 %v939
        %v1133 = vpop.f32.mrb[0].mxu0
        %v1134 = vadd.f32 0.0, %v1133
        %v1135 = vpop.f32.mrb[0].mxu0
        %v1136 = vpop.f32.mrb[0].mxu0
        %v1137 = vadd.f32 0.0, %v1136
        %v1138 = vpop.f32.mrb[0].mxu0
        %1139 = vmatprep.mubr.bf16.mxu0 0
        %1140 = vmatmul.mubr.bf16.gmra.mrb[0].mxu0 %v942
        %v1141 = vpop.f32.mrb[0].mxu0
        %v1142 = vadd.f32 0.0, %v1141
        %v1143 = vpop.f32.mrb[0].mxu0
        %v1144 = vpop.f32.mrb[0].mxu0
        %v1145 = vadd.f32 0.0, %v1144
        %v1146 = vpop.f32.mrb[0].mxu0
        %1147 = vmatprep.mubr.bf16.mxu0 0
        %1148 = vmatmul.mubr.bf16.gmra.mrb[0].mxu0 %v1070
        %v1149 = vpop.f32.mrb[0].mxu0
        %v1150 = vadd.f32 0.0, %v1149
        %v1151 = vpop.f32.mrb[0].mxu0
        %v1152 = vpop.f32.mrb[0].mxu0
        %v1153 = vadd.f32 0.0, %v1152
        %v1154 = vpop.f32.mrb[0].mxu0
        %1155 = vdwg.mxu0
        %v1156 = vadd.f32 %v1028, %v1110
        %v1157 = vadd.f32 %v1029, %v1113
        %v1158 = vadd.f32 %v1030, %v1118
        %v1159 = vadd.f32 %v1031, %v1121
        %v1160 = vadd.f32 %v1032, %v1126
        %v1161 = vadd.f32 %v1033, %v1129
        %v1162 = vadd.f32 %v1034, %v1134
        %v1163 = vadd.f32 %v1035, %v1137
        %v1164 = vadd.f32 %v1036, %v1142
        %v1165 = vadd.f32 %v1037, %v1145
        %v1166 = vadd.f32 %v1038, %v1150
        %v1167 = vadd.f32 %v1039, %v1153
        %v1169 = vshrl.u32 %v421, 16
        %v1171 = vrot.slane %v1169, 4
        %v1172 = vshll.u32 %v421, 16
        %v1174 = vrot.slane %v1172, 5
        %v1175 = vor.u32 %v1171, %v1174
        %v1176 = vrot.slane %v1175, 4
        %v1178 = vshll.u32 %v422, 16
        %v1180 = vrot.slane %v1178, 5
        %v1181 = vsel %vm761, %v1176, %v1180
        %v1182 = vshrl.u32 %v422, 16
        %v1184 = vrot.slane %v1182, 4
        %v1185 = vor.u32 %v1184, %v1180
        %v1186 = vrot.slane %v1185, 4
        %v1188 = vshll.u32 %v423, 16
        %v1190 = vrot.slane %v1188, 5
        %v1191 = vsel %vm761, %v1186, %v1190
        %s1192 = scalar_lea.vmem [#allocation5], 14
        %v1193 = vld [vmem:[%s1192] sm:$0x3]
        %v1194 = vunpack.c.l.b16 %v1181
        %v1195 = vunpack.c.l.b16 %v1191
        %v1196 = vpack.c.b16 %v1195, %v1194
        %v1198 = vsel %vm457, %v1196, 0
        %v1201 = vsel %vm476, %v1193, 0
        %1203 = vmatprep.subr.bf16.mxu0 0
        %1204 = vmatpush1.bf16.msra.mxu0 %v1201
        %1205 = vmatprep.subr.bf16.mxu0 0
        %1206 = vmatpush1.bf16.msra.mxu0 0
        %1207 = vmatprep.subr.bf16.mxu0 0
        %1208 = vmatpush1.bf16.msra.mxu0 0
        %1209 = vmatprep.subr.bf16.mxu0 0
        %1210 = vmatpush1.bf16.msra.mxu0 0
        %1211 = vmatprep.subr.bf16.mxu0 0
        %1212 = vmatpush1.bf16.msra.mxu0 0
        %1213 = vmatprep.subr.bf16.mxu0 0
        %1214 = vmatpush1.bf16.msra.mxu0 0
        %1215 = vmatprep.subr.bf16.mxu0 0
        %1216 = vmatpush1.bf16.msra.mxu0 0
        %1217 = vmatprep.subr.bf16.mxu0 0
        %1218 = vmatpush1.bf16.msra.mxu0 0
        %1219 = vmatprep.subr.bf16.mxu0 0
        %1220 = vmatpush1.bf16.msra.mxu0 0
        %1221 = vmatprep.subr.bf16.mxu0 0
        %1222 = vmatpush1.bf16.msra.mxu0 0
        %1223 = vmatprep.subr.bf16.mxu0 0
        %1224 = vmatpush1.bf16.msra.mxu0 0
        %1225 = vmatprep.subr.bf16.mxu0 0
        %1226 = vmatpush1.bf16.msra.mxu0 0
        %1227 = vmatprep.subr.bf16.mxu0 0
        %1228 = vmatpush1.bf16.msra.mxu0 0
        %1229 = vmatprep.subr.bf16.mxu0 0
        %1230 = vmatpush1.bf16.msra.mxu0 0
        %1231 = vmatprep.subr.bf16.mxu0 0
        %1232 = vmatpush1.bf16.msra.mxu0 0
        %1233 = vmatprep.subr.bf16.mxu0 0
        %1234 = vmatpush1.bf16.msra.mxu0 0
        %1235 = vmatprep.mubr.bf16.mxu0 0
        %1236 = vmatmul.mubr.bf16.gmra.mrb[0].mxu0 %v933
        %v1237 = vpop.f32.mrb[0].mxu0
        %v1238 = vadd.f32 0.0, %v1237
        %v1239 = vpop.f32.mrb[0].mxu0
        %v1240 = vpop.f32.mrb[0].mxu0
        %v1241 = vadd.f32 0.0, %v1240
        %v1242 = vpop.f32.mrb[0].mxu0
        %1243 = vmatprep.mubr.bf16.mxu0 0
        %1244 = vmatmul.mubr.bf16.gmra.mrb[0].mxu0 %v936
        %v1245 = vpop.f32.mrb[0].mxu0
        %v1246 = vadd.f32 0.0, %v1245
        %v1247 = vpop.f32.mrb[0].mxu0
        %v1248 = vpop.f32.mrb[0].mxu0
        %v1249 = vadd.f32 0.0, %v1248
        %v1250 = vpop.f32.mrb[0].mxu0
        %1251 = vmatprep.mubr.bf16.mxu0 0
        %1252 = vmatmul.mubr.bf16.gmra.mrb[0].mxu0 %v939
        %v1253 = vpop.f32.mrb[0].mxu0
        %v1254 = vadd.f32 0.0, %v1253
        %v1255 = vpop.f32.mrb[0].mxu0
        %v1256 = vpop.f32.mrb[0].mxu0
        %v1257 = vadd.f32 0.0, %v1256
        %v1258 = vpop.f32.mrb[0].mxu0
        %1259 = vmatprep.mubr.bf16.mxu0 0
        %1260 = vmatmul.mubr.bf16.gmra.mrb[0].mxu0 %v942
        %v1261 = vpop.f32.mrb[0].mxu0
        %v1262 = vadd.f32 0.0, %v1261
        %v1263 = vpop.f32.mrb[0].mxu0
        %v1264 = vpop.f32.mrb[0].mxu0
        %v1265 = vadd.f32 0.0, %v1264
        %v1266 = vpop.f32.mrb[0].mxu0
        %1267 = vmatprep.mubr.bf16.mxu0 0
        %1268 = vmatmul.mubr.bf16.gmra.mrb[0].mxu0 %v1070
        %v1269 = vpop.f32.mrb[0].mxu0
        %v1270 = vadd.f32 0.0, %v1269
        %v1271 = vpop.f32.mrb[0].mxu0
        %v1272 = vpop.f32.mrb[0].mxu0
        %v1273 = vadd.f32 0.0, %v1272
        %v1274 = vpop.f32.mrb[0].mxu0
        %1275 = vmatprep.mubr.bf16.mxu0 0
        %1276 = vmatmul.mubr.bf16.gmra.mrb[0].mxu0 %v1198
        %v1277 = vpop.f32.mrb[0].mxu0
        %v1278 = vadd.f32 0.0, %v1277
        %v1279 = vpop.f32.mrb[0].mxu0
        %v1280 = vpop.f32.mrb[0].mxu0
        %v1281 = vadd.f32 0.0, %v1280
        %v1282 = vpop.f32.mrb[0].mxu0
        %1283 = vdwg.mxu0
        %v1284 = vadd.f32 %v1156, %v1238
        %v1285 = vadd.f32 %v1157, %v1241
        %v1286 = vadd.f32 %v1158, %v1246
        %v1287 = vadd.f32 %v1159, %v1249
        %v1288 = vadd.f32 %v1160, %v1254
        %v1289 = vadd.f32 %v1161, %v1257
        %v1290 = vadd.f32 %v1162, %v1262
        %v1291 = vadd.f32 %v1163, %v1265
        %v1292 = vadd.f32 %v1164, %v1270
        %v1293 = vadd.f32 %v1165, %v1273
        %v1294 = vadd.f32 %v1166, %v1278
        %v1295 = vadd.f32 %v1167, %v1281
        %vm1302 = vcmask 1042432
        %vm1303 = vcmask 1046532
        %vm1304 = vmor %vm1302, %vm1303
        %v1305 = vrot.slane %v400, 5
        %v1306 = vrot.slane %v1305, 4
        %v1307 = vrot.slane %v401, 5
        %v1308 = vsel %vm1304, %v1306, %v1307
        %v1309 = vrot.slane %v1307, 4
        %v1310 = vrot.slane %v402, 5
        %v1311 = vsel %vm1304, %v1309, %v1310
        %v1312 = vrot.slane %v403, 5
        %v1313 = vrot.slane %v1312, 4
        %v1314 = vrot.slane %v404, 5
        %v1315 = vsel %vm1304, %v1313, %v1314
        %v1316 = vrot.slane %v1314, 4
        %v1317 = vrot.slane %v405, 5
        %v1318 = vsel %vm1304, %v1316, %v1317
        %v1319 = vrot.slane %v406, 5
        %v1320 = vrot.slane %v1319, 4
        %v1321 = vrot.slane %v407, 5
        %v1322 = vsel %vm1304, %v1320, %v1321
        %v1323 = vrot.slane %v1321, 4
        %v1324 = vrot.slane %v408, 5
        %v1325 = vsel %vm1304, %v1323, %v1324
        %v1326 = vrot.slane %v409, 5
        %v1327 = vrot.slane %v1326, 4
        %v1328 = vrot.slane %v410, 5
        %v1329 = vsel %vm1304, %v1327, %v1328
        %v1330 = vrot.slane %v1328, 4
        %v1331 = vrot.slane %v411, 5
        %v1332 = vsel %vm1304, %v1330, %v1331
        %v1333 = vrot.slane %v412, 5
        %v1334 = vrot.slane %v1333, 4
        %v1335 = vrot.slane %v413, 5
        %v1336 = vsel %vm1304, %v1334, %v1335
        %v1337 = vrot.slane %v1335, 4
        %v1338 = vrot.slane %v414, 5
        %v1339 = vsel %vm1304, %v1337, %v1338
        %v1340 = vrot.slane %v415, 5
        %v1341 = vrot.slane %v1340, 4
        %v1342 = vrot.slane %v416, 5
        %v1343 = vsel %vm1304, %v1341, %v1342
        %v1344 = vrot.slane %v1342, 4
        %v1345 = vrot.slane %v417, 5
        %v1346 = vsel %vm1304, %v1344, %v1345
        %s1347 = scalar_lea.vmem [#allocation5], 4
        %v1348 = vld [vmem:[%s1347] sm:$0x3]
        %v1349 = vunpack.c.l.b16 %v1308
        %v1350 = vunpack.c.l.b16 %v1311
        %v1351 = vunpack.c.l.b16 %v1315
        %v1352 = vunpack.c.l.b16 %v1318
        %v1353 = vunpack.c.l.b16 %v1322
        %v1354 = vunpack.c.l.b16 %v1325
        %v1355 = vunpack.c.l.b16 %v1329
        %v1356 = vunpack.c.l.b16 %v1332
        %v1357 = vunpack.c.l.b16 %v1336
        %v1358 = vunpack.c.l.b16 %v1339
        %v1359 = vunpack.c.l.b16 %v1343
        %v1360 = vunpack.c.l.b16 %v1346
        %v1361 = vpack.c.b16 %v1350, %v1349
        %v1362 = vpack.c.b16 %v1352, %v1351
        %v1363 = vpack.c.b16 %v1354, %v1353
        %v1364 = vpack.c.b16 %v1356, %v1355
        %v1365 = vpack.c.b16 %v1358, %v1357
        %v1366 = vpack.c.b16 %v1360, %v1359
        %v1368 = vsel %vm457, %v1361, 0
        %v1371 = vsel %vm457, %v1362, 0
        %v1374 = vsel %vm457, %v1363, 0
        %v1377 = vsel %vm457, %v1364, 0
        %v1380 = vsel %vm457, %v1365, 0
        %v1383 = vsel %vm457, %v1366, 0
        %v1386 = vsel %vm476, %v1348, 0
        %1388 = vmatprep.subr.bf16.mxu0 0
        %1389 = vmatpush1.bf16.msra.mxu0 %v1386
        %1390 = vmatprep.subr.bf16.mxu0 0
        %1391 = vmatpush1.bf16.msra.mxu0 0
        %1392 = vmatprep.subr.bf16.mxu0 0
        %1393 = vmatpush1.bf16.msra.mxu0 0
        %1394 = vmatprep.subr.bf16.mxu0 0
        %1395 = vmatpush1.bf16.msra.mxu0 0
        %1396 = vmatprep.subr.bf16.mxu0 0
        %1397 = vmatpush1.bf16.msra.mxu0 0
        %1398 = vmatprep.subr.bf16.mxu0 0
        %1399 = vmatpush1.bf16.msra.mxu0 0
        %1400 = vmatprep.subr.bf16.mxu0 0
        %1401 = vmatpush1.bf16.msra.mxu0 0
        %1402 = vmatprep.subr.bf16.mxu0 0
        %1403 = vmatpush1.bf16.msra.mxu0 0
        %1404 = vmatprep.subr.bf16.mxu0 0
        %1405 = vmatpush1.bf16.msra.mxu0 0
        %1406 = vmatprep.subr.bf16.mxu0 0
        %1407 = vmatpush1.bf16.msra.mxu0 0
        %1408 = vmatprep.subr.bf16.mxu0 0
        %1409 = vmatpush1.bf16.msra.mxu0 0
        %1410 = vmatprep.subr.bf16.mxu0 0
        %1411 = vmatpush1.bf16.msra.mxu0 0
        %1412 = vmatprep.subr.bf16.mxu0 0
        %1413 = vmatpush1.bf16.msra.mxu0 0
        %1414 = vmatprep.subr.bf16.mxu0 0
        %1415 = vmatpush1.bf16.msra.mxu0 0
        %1416 = vmatprep.subr.bf16.mxu0 0
        %1417 = vmatpush1.bf16.msra.mxu0 0
        %1418 = vmatprep.subr.bf16.mxu0 0
        %1419 = vmatpush1.bf16.msra.mxu0 0
        %1420 = vmatprep.mubr.bf16.mxu0 0
        %1421 = vmatmul.mubr.bf16.gmra.mrb[0].mxu0 %v1368
        %v1422 = vpop.f32.mrb[0].mxu0
        %v1423 = vadd.f32 0.0, %v1422
        %v1424 = vpop.f32.mrb[0].mxu0
        %v1425 = vpop.f32.mrb[0].mxu0
        %v1426 = vadd.f32 0.0, %v1425
        %v1427 = vpop.f32.mrb[0].mxu0
        %1428 = vmatprep.mubr.bf16.mxu0 0
        %1429 = vmatmul.mubr.bf16.gmra.mrb[0].mxu0 %v1371
        %v1430 = vpop.f32.mrb[0].mxu0
        %v1431 = vadd.f32 0.0, %v1430
        %v1432 = vpop.f32.mrb[0].mxu0
        %v1433 = vpop.f32.mrb[0].mxu0
        %v1434 = vadd.f32 0.0, %v1433
        %v1435 = vpop.f32.mrb[0].mxu0
        %1436 = vmatprep.mubr.bf16.mxu0 0
        %1437 = vmatmul.mubr.bf16.gmra.mrb[0].mxu0 %v1374
        %v1438 = vpop.f32.mrb[0].mxu0
        %v1439 = vadd.f32 0.0, %v1438
        %v1440 = vpop.f32.mrb[0].mxu0
        %v1441 = vpop.f32.mrb[0].mxu0
        %v1442 = vadd.f32 0.0, %v1441
        %v1443 = vpop.f32.mrb[0].mxu0
        %1444 = vmatprep.mubr.bf16.mxu0 0
        %1445 = vmatmul.mubr.bf16.gmra.mrb[0].mxu0 %v1377
        %v1446 = vpop.f32.mrb[0].mxu0
        %v1447 = vadd.f32 0.0, %v1446
        %v1448 = vpop.f32.mrb[0].mxu0
        %v1449 = vpop.f32.mrb[0].mxu0
        %v1450 = vadd.f32 0.0, %v1449
        %v1451 = vpop.f32.mrb[0].mxu0
        %1452 = vmatprep.mubr.bf16.mxu0 0
        %1453 = vmatmul.mubr.bf16.gmra.mrb[0].mxu0 %v1380
        %v1454 = vpop.f32.mrb[0].mxu0
        %v1455 = vadd.f32 0.0, %v1454
        %v1456 = vpop.f32.mrb[0].mxu0
        %v1457 = vpop.f32.mrb[0].mxu0
        %v1458 = vadd.f32 0.0, %v1457
        %v1459 = vpop.f32.mrb[0].mxu0
        %1460 = vmatprep.mubr.bf16.mxu0 0
        %1461 = vmatmul.mubr.bf16.gmra.mrb[0].mxu0 %v1383
        %v1462 = vpop.f32.mrb[0].mxu0
        %v1463 = vadd.f32 0.0, %v1462
        %v1464 = vpop.f32.mrb[0].mxu0
        %v1465 = vpop.f32.mrb[0].mxu0
        %v1466 = vadd.f32 0.0, %v1465
        %v1467 = vpop.f32.mrb[0].mxu0
        %1468 = vdwg.mxu0
        %v1469 = vadd.f32 %v1284, %v1423
        %v1470 = vadd.f32 %v1285, %v1426
        %v1471 = vadd.f32 %v1286, %v1431
        %v1472 = vadd.f32 %v1287, %v1434
        %v1473 = vadd.f32 %v1288, %v1439
        %v1474 = vadd.f32 %v1289, %v1442
        %v1475 = vadd.f32 %v1290, %v1447
        %v1476 = vadd.f32 %v1291, %v1450
        %v1477 = vadd.f32 %v1292, %v1455
        %v1478 = vadd.f32 %v1293, %v1458
        %v1479 = vadd.f32 %v1294, %v1463
        %v1480 = vadd.f32 %v1295, %v1466
        %v1482 = vrot.slane %v418, 5
        %v1483 = vrot.slane %v1482, 4
        %v1484 = vrot.slane %v419, 5
        %v1485 = vsel %vm1304, %v1483, %v1484
        %v1486 = vrot.slane %v1484, 4
        %v1487 = vrot.slane %v420, 5
        %v1488 = vsel %vm1304, %v1486, %v1487
        %s1489 = scalar_lea.vmem [#allocation5], 10
        %v1490 = vld [vmem:[%s1489] sm:$0x3]
        %v1491 = vunpack.c.l.b16 %v1485
        %v1492 = vunpack.c.l.b16 %v1488
        %v1493 = vpack.c.b16 %v1492, %v1491
        %v1495 = vsel %vm457, %v1493, 0
        %v1498 = vsel %vm476, %v1490, 0
        %1500 = vmatprep.subr.bf16.mxu0 0
        %1501 = vmatpush1.bf16.msra.mxu0 %v1498
        %1502 = vmatprep.subr.bf16.mxu0 0
        %1503 = vmatpush1.bf16.msra.mxu0 0
        %1504 = vmatprep.subr.bf16.mxu0 0
        %1505 = vmatpush1.bf16.msra.mxu0 0
        %1506 = vmatprep.subr.bf16.mxu0 0
        %1507 = vmatpush1.bf16.msra.mxu0 0
        %1508 = vmatprep.subr.bf16.mxu0 0
        %1509 = vmatpush1.bf16.msra.mxu0 0
        %1510 = vmatprep.subr.bf16.mxu0 0
        %1511 = vmatpush1.bf16.msra.mxu0 0
        %1512 = vmatprep.subr.bf16.mxu0 0
        %1513 = vmatpush1.bf16.msra.mxu0 0
        %1514 = vmatprep.subr.bf16.mxu0 0
        %1515 = vmatpush1.bf16.msra.mxu0 0
        %1516 = vmatprep.subr.bf16.mxu0 0
        %1517 = vmatpush1.bf16.msra.mxu0 0
        %1518 = vmatprep.subr.bf16.mxu0 0
        %1519 = vmatpush1.bf16.msra.mxu0 0
        %1520 = vmatprep.subr.bf16.mxu0 0
        %1521 = vmatpush1.bf16.msra.mxu0 0
        %1522 = vmatprep.subr.bf16.mxu0 0
        %1523 = vmatpush1.bf16.msra.mxu0 0
        %1524 = vmatprep.subr.bf16.mxu0 0
        %1525 = vmatpush1.bf16.msra.mxu0 0
        %1526 = vmatprep.subr.bf16.mxu0 0
        %1527 = vmatpush1.bf16.msra.mxu0 0
        %1528 = vmatprep.subr.bf16.mxu0 0
        %1529 = vmatpush1.bf16.msra.mxu0 0
        %1530 = vmatprep.subr.bf16.mxu0 0
        %1531 = vmatpush1.bf16.msra.mxu0 0
        %1532 = vmatprep.mubr.bf16.mxu0 0
        %1533 = vmatmul.mubr.bf16.gmra.mrb[0].mxu0 %v1371
        %v1534 = vpop.f32.mrb[0].mxu0
        %v1535 = vadd.f32 0.0, %v1534
        %v1536 = vpop.f32.mrb[0].mxu0
        %v1537 = vpop.f32.mrb[0].mxu0
        %v1538 = vadd.f32 0.0, %v1537
        %v1539 = vpop.f32.mrb[0].mxu0
        %1540 = vmatprep.mubr.bf16.mxu0 0
        %1541 = vmatmul.mubr.bf16.gmra.mrb[0].mxu0 %v1374
        %v1542 = vpop.f32.mrb[0].mxu0
        %v1543 = vadd.f32 0.0, %v1542
        %v1544 = vpop.f32.mrb[0].mxu0
        %v1545 = vpop.f32.mrb[0].mxu0
        %v1546 = vadd.f32 0.0, %v1545
        %v1547 = vpop.f32.mrb[0].mxu0
        %1548 = vmatprep.mubr.bf16.mxu0 0
        %1549 = vmatmul.mubr.bf16.gmra.mrb[0].mxu0 %v1377
        %v1550 = vpop.f32.mrb[0].mxu0
        %v1551 = vadd.f32 0.0, %v1550
        %v1552 = vpop.f32.mrb[0].mxu0
        %v1553 = vpop.f32.mrb[0].mxu0
        %v1554 = vadd.f32 0.0, %v1553
        %v1555 = vpop.f32.mrb[0].mxu0
        %1556 = vmatprep.mubr.bf16.mxu0 0
        %1557 = vmatmul.mubr.bf16.gmra.mrb[0].mxu0 %v1380
        %v1558 = vpop.f32.mrb[0].mxu0
        %v1559 = vadd.f32 0.0, %v1558
        %v1560 = vpop.f32.mrb[0].mxu0
        %v1561 = vpop.f32.mrb[0].mxu0
        %v1562 = vadd.f32 0.0, %v1561
        %v1563 = vpop.f32.mrb[0].mxu0
        %1564 = vmatprep.mubr.bf16.mxu0 0
        %1565 = vmatmul.mubr.bf16.gmra.mrb[0].mxu0 %v1383
        %v1566 = vpop.f32.mrb[0].mxu0
        %v1567 = vadd.f32 0.0, %v1566
        %v1568 = vpop.f32.mrb[0].mxu0
        %v1569 = vpop.f32.mrb[0].mxu0
        %v1570 = vadd.f32 0.0, %v1569
        %v1571 = vpop.f32.mrb[0].mxu0
        %1572 = vmatprep.mubr.bf16.mxu0 0
        %1573 = vmatmul.mubr.bf16.gmra.mrb[0].mxu0 %v1495
        %v1574 = vpop.f32.mrb[0].mxu0
        %v1575 = vadd.f32 0.0, %v1574
        %v1576 = vpop.f32.mrb[0].mxu0
        %v1577 = vpop.f32.mrb[0].mxu0
        %v1578 = vadd.f32 0.0, %v1577
        %v1579 = vpop.f32.mrb[0].mxu0
        %1580 = vdwg.mxu0
        %v1581 = vadd.f32 %v1469, %v1535
        %v1582 = vadd.f32 %v1470, %v1538
        %v1583 = vadd.f32 %v1471, %v1543
        %v1584 = vadd.f32 %v1472, %v1546
        %v1585 = vadd.f32 %v1473, %v1551
        %v1586 = vadd.f32 %v1474, %v1554
        %v1587 = vadd.f32 %v1475, %v1559
        %v1588 = vadd.f32 %v1476, %v1562
        %v1589 = vadd.f32 %v1477, %v1567
        %v1590 = vadd.f32 %v1478, %v1570
        %v1591 = vadd.f32 %v1479, %v1575
        %v1592 = vadd.f32 %v1480, %v1578
        %v1594 = vrot.slane %v421, 5
        %v1595 = vrot.slane %v1594, 4
        %v1596 = vrot.slane %v422, 5
        %v1597 = vsel %vm1304, %v1595, %v1596
        %v1598 = vrot.slane %v1596, 4
        %v1599 = vrot.slane %v423, 5
        %v1600 = vsel %vm1304, %v1598, %v1599
        %s1601 = scalar_lea.vmem [#allocation5], 16
        %v1602 = vld [vmem:[%s1601] sm:$0x3]
        %v1603 = vunpack.c.l.b16 %v1597
        %v1604 = vunpack.c.l.b16 %v1600
        %v1605 = vpack.c.b16 %v1604, %v1603
        %v1607 = vsel %vm457, %v1605, 0
        %v1610 = vsel %vm476, %v1602, 0
        %1612 = vmatprep.subr.bf16.mxu0 0
        %1613 = vmatpush1.bf16.msra.mxu0 %v1610
        %1614 = vmatprep.subr.bf16.mxu0 0
        %1615 = vmatpush1.bf16.msra.mxu0 0
        %1616 = vmatprep.subr.bf16.mxu0 0
        %1617 = vmatpush1.bf16.msra.mxu0 0
        %1618 = vmatprep.subr.bf16.mxu0 0
        %1619 = vmatpush1.bf16.msra.mxu0 0
        %1620 = vmatprep.subr.bf16.mxu0 0
        %1621 = vmatpush1.bf16.msra.mxu0 0
        %1622 = vmatprep.subr.bf16.mxu0 0
        %1623 = vmatpush1.bf16.msra.mxu0 0
        %1624 = vmatprep.subr.bf16.mxu0 0
        %1625 = vmatpush1.bf16.msra.mxu0 0
        %1626 = vmatprep.subr.bf16.mxu0 0
        %1627 = vmatpush1.bf16.msra.mxu0 0
        %1628 = vmatprep.subr.bf16.mxu0 0
        %1629 = vmatpush1.bf16.msra.mxu0 0
        %1630 = vmatprep.subr.bf16.mxu0 0
        %1631 = vmatpush1.bf16.msra.mxu0 0
        %1632 = vmatprep.subr.bf16.mxu0 0
        %1633 = vmatpush1.bf16.msra.mxu0 0
        %1634 = vmatprep.subr.bf16.mxu0 0
        %1635 = vmatpush1.bf16.msra.mxu0 0
        %1636 = vmatprep.subr.bf16.mxu0 0
        %1637 = vmatpush1.bf16.msra.mxu0 0
        %1638 = vmatprep.subr.bf16.mxu0 0
        %1639 = vmatpush1.bf16.msra.mxu0 0
        %1640 = vmatprep.subr.bf16.mxu0 0
        %1641 = vmatpush1.bf16.msra.mxu0 0
        %1642 = vmatprep.subr.bf16.mxu0 0
        %1643 = vmatpush1.bf16.msra.mxu0 0
        %1644 = vmatprep.mubr.bf16.mxu0 0
        %1645 = vmatmul.mubr.bf16.gmra.mrb[0].mxu0 %v1374
        %v1646 = vpop.f32.mrb[0].mxu0
        %v1647 = vadd.f32 0.0, %v1646
        %v1648 = vpop.f32.mrb[0].mxu0
        %v1649 = vpop.f32.mrb[0].mxu0
        %v1650 = vadd.f32 0.0, %v1649
        %v1651 = vpop.f32.mrb[0].mxu0
        %1652 = vmatprep.mubr.bf16.mxu0 0
        %1653 = vmatmul.mubr.bf16.gmra.mrb[0].mxu0 %v1377
        %v1654 = vpop.f32.mrb[0].mxu0
        %v1655 = vadd.f32 0.0, %v1654
        %v1656 = vpop.f32.mrb[0].mxu0
        %v1657 = vpop.f32.mrb[0].mxu0
        %v1658 = vadd.f32 0.0, %v1657
        %v1659 = vpop.f32.mrb[0].mxu0
        %1660 = vmatprep.mubr.bf16.mxu0 0
        %1661 = vmatmul.mubr.bf16.gmra.mrb[0].mxu0 %v1380
        %v1662 = vpop.f32.mrb[0].mxu0
        %v1663 = vadd.f32 0.0, %v1662
        %v1664 = vpop.f32.mrb[0].mxu0
        %v1665 = vpop.f32.mrb[0].mxu0
        %v1666 = vadd.f32 0.0, %v1665
        %v1667 = vpop.f32.mrb[0].mxu0
        %1668 = vmatprep.mubr.bf16.mxu0 0
        %1669 = vmatmul.mubr.bf16.gmra.mrb[0].mxu0 %v1383
        %v1670 = vpop.f32.mrb[0].mxu0
        %v1671 = vadd.f32 0.0, %v1670
        %v1672 = vpop.f32.mrb[0].mxu0
        %v1673 = vpop.f32.mrb[0].mxu0
        %v1674 = vadd.f32 0.0, %v1673
        %v1675 = vpop.f32.mrb[0].mxu0
        %1676 = vmatprep.mubr.bf16.mxu0 0
        %1677 = vmatmul.mubr.bf16.gmra.mrb[0].mxu0 %v1495
        %v1678 = vpop.f32.mrb[0].mxu0
        %v1679 = vadd.f32 0.0, %v1678
        %v1680 = vpop.f32.mrb[0].mxu0
        %v1681 = vpop.f32.mrb[0].mxu0
        %v1682 = vadd.f32 0.0, %v1681
        %v1683 = vpop.f32.mrb[0].mxu0
        %1684 = vmatprep.mubr.bf16.mxu0 0
        %1685 = vmatmul.mubr.bf16.gmra.mrb[0].mxu0 %v1607
        %v1686 = vpop.f32.mrb[0].mxu0
        %v1687 = vadd.f32 0.0, %v1686
        %v1688 = vpop.f32.mrb[0].mxu0
        %v1689 = vpop.f32.mrb[0].mxu0
        %v1690 = vadd.f32 0.0, %v1689
        %v1691 = vpop.f32.mrb[0].mxu0
        %1692 = vdwg.mxu0
        %v1693 = vadd.f32 %v1581, %v1647
        %v1694 = vadd.f32 %v1582, %v1650
        %v1695 = vadd.f32 %v1583, %v1655
        %v1696 = vadd.f32 %v1584, %v1658
        %v1697 = vadd.f32 %v1585, %v1663
        %v1698 = vadd.f32 %v1586, %v1666
        %v1699 = vadd.f32 %v1587, %v1671
        %v1700 = vadd.f32 %v1588, %v1674
        %v1701 = vadd.f32 %v1589, %v1679
        %v1702 = vadd.f32 %v1590, %v1682
        %v1703 = vadd.f32 %v1591, %v1687
        %v1704 = vadd.f32 %v1592, %v1690
        %v1705 = vld [vmem:[#allocation7] sm:$0x1]
        %v1707 = vlaneseq
        %v1708 = vshrl.u32 %v1707, 7
        %v1709 = vsub.s32 0, %v1708
        %v1710 = vrot.slane %v1705, %v1709
        %v1712 = vmul.f32 %v1693, %v1710
        %v1713 = vmul.f32 %v1694, %v1710
        %v1714 = vmul.f32 %v1695, %v1710
        %v1715 = vmul.f32 %v1696, %v1710
        %v1716 = vmul.f32 %v1697, %v1710
        %v1717 = vmul.f32 %v1698, %v1710
        %v1718 = vmul.f32 %v1699, %v1710
        %v1719 = vmul.f32 %v1700, %v1710
        %v1720 = vmul.f32 %v1701, %v1710
        %v1721 = vmul.f32 %v1702, %v1710
        %v1722 = vmul.f32 %v1703, %v1710
        %v1723 = vmul.f32 %v1704, %v1710
        %v1724 = vld [vmem:[#allocation8] sm:$0x1]
        %v1726 = vlaneseq
        %v1727 = vshrl.u32 %v1726, 7
        %v1728 = vsub.s32 0, %v1727
        %v1729 = vrot.slane %v1724, %v1728
        %v1731 = vadd.f32 %v1712, %v1729
        %v1732 = vadd.f32 %v1713, %v1729
        %v1733 = vadd.f32 %v1714, %v1729
        %v1734 = vadd.f32 %v1715, %v1729
        %v1735 = vadd.f32 %v1716, %v1729
        %v1736 = vadd.f32 %v1717, %v1729
        %v1737 = vadd.f32 %v1718, %v1729
        %v1738 = vadd.f32 %v1719, %v1729
        %v1739 = vadd.f32 %v1720, %v1729
        %v1740 = vadd.f32 %v1721, %v1729
        %v1741 = vadd.f32 %v1722, %v1729
        %v1742 = vadd.f32 %v1723, %v1729
        %v1743 = vmax.f32 %v1731, 0.0
        %v1744 = vmax.f32 %v1732, 0.0
        %v1745 = vmax.f32 %v1733, 0.0
        %v1746 = vmax.f32 %v1734, 0.0
        %v1747 = vmax.f32 %v1735, 0.0
        %v1748 = vmax.f32 %v1736, 0.0
        %v1749 = vmax.f32 %v1737, 0.0
        %v1750 = vmax.f32 %v1738, 0.0
        %v1751 = vmax.f32 %v1739, 0.0
        %v1752 = vmax.f32 %v1740, 0.0
        %v1753 = vmax.f32 %v1741, 0.0
        %v1754 = vmax.f32 %v1742, 0.0
        %s1755 = smul.u32 %s32, 4
        %s1756 = ssub.s32 %s1755, 1
        %v1757 = vstv %s1756
        %v1758 = vadd.s32 %v1757, 1
        %v1759 = vadd.s32 %v1757, 2
        %v1760 = vadd.s32 %v1757, 3
        %v1761 = vadd.s32 %v1757, 4
        %v1762 = vadd.s32 %v1757, 5
        %v1763 = vlaneseq
        %v1764 = vshrl.u32 %v1763, 7
        %v1765 = vadd.s32 %v1764, 8
        %v1766 = vsub.s32 %v1764, 1
        %v1767 = vsub.s32 %v1765, 1
        %vm1768 = vcmp.ge.s32.totalorder %v1757, 0
        %vm1769 = vcmp.ge.s32.totalorder %v1758, 0
        %vm1770 = vcmp.ge.s32.totalorder %v1759, 0
        %vm1771 = vcmp.ge.s32.totalorder %v1760, 0
        %vm1772 = vcmp.ge.s32.totalorder %v1761, 0
        %vm1773 = vcmp.ge.s32.totalorder %v1762, 0
        %vm1774 = vcmp.lt.s32.totalorder %v1757, 8
        %vm1775 = vcmp.lt.s32.totalorder %v1758, 8
        %vm1776 = vcmp.lt.s32.totalorder %v1759, 8
        %vm1777 = vcmp.lt.s32.totalorder %v1760, 8
        %vm1778 = vcmp.lt.s32.totalorder %v1761, 8
        %vm1779 = vcmp.lt.s32.totalorder %v1762, 8
        %vm1780 = vmand %vm1768, %vm1774
        %vm1781 = vmand %vm1769, %vm1775
        %vm1782 = vmand %vm1770, %vm1776
        %vm1783 = vmand %vm1771, %vm1777
        %vm1784 = vmand %vm1772, %vm1778
        %vm1785 = vmand %vm1773, %vm1779
        %vm1786 = vcmp.ge.s32.totalorder %v1766, 0
        %vm1787 = vcmp.ge.s32.totalorder %v1767, 0
        %vm1788 = vmand %vm1780, %vm1786
        %vm1789 = vmand %vm1780, %vm1787
        %vm1790 = vmand %vm1781, %vm1786
        %vm1791 = vmand %vm1781, %vm1787
        %vm1792 = vmand %vm1782, %vm1786
        %vm1793 = vmand %vm1782, %vm1787
        %vm1794 = vmand %vm1783, %vm1786
        %vm1795 = vmand %vm1783, %vm1787
        %vm1796 = vmand %vm1784, %vm1786
        %vm1797 = vmand %vm1784, %vm1787
        %vm1798 = vmand %vm1785, %vm1786
        %vm1799 = vmand %vm1785, %vm1787
        %vm1800 = vcmp.lt.s32.totalorder %v1766, 8
        %vm1801 = vcmp.lt.s32.totalorder %v1767, 8
        %vm1802 = vmand %vm1788, %vm1800
        %vm1803 = vmand %vm1789, %vm1801
        %vm1804 = vmand %vm1790, %vm1800
        %vm1805 = vmand %vm1791, %vm1801
        %vm1806 = vmand %vm1792, %vm1800
        %vm1807 = vmand %vm1793, %vm1801
        %vm1808 = vmand %vm1794, %vm1800
        %vm1809 = vmand %vm1795, %vm1801
        %vm1810 = vmand %vm1796, %vm1800
        %vm1811 = vmand %vm1797, %vm1801
        %vm1812 = vmand %vm1798, %vm1800
        %vm1813 = vmand %vm1799, %vm1801
        %v1814 = vsel %vm1802, 1, 0
        %v1815 = vsel %vm1803, 1, 0
        %v1816 = vsel %vm1804, 1, 0
        %v1817 = vsel %vm1805, 1, 0
        %v1818 = vsel %vm1806, 1, 0
        %v1819 = vsel %vm1807, 1, 0
        %v1820 = vsel %vm1808, 1, 0
        %v1821 = vsel %vm1809, 1, 0
        %v1822 = vsel %vm1810, 1, 0
        %v1823 = vsel %vm1811, 1, 0
        %v1824 = vsel %vm1812, 1, 0
        %v1825 = vsel %vm1813, 1, 0
        %vm1826 = vcmp.eq.s32.totalorder %v1814, 1
        %vm1827 = vcmp.eq.s32.totalorder %v1815, 1
        %vm1828 = vcmp.eq.s32.totalorder %v1816, 1
        %vm1829 = vcmp.eq.s32.totalorder %v1817, 1
        %vm1830 = vcmp.eq.s32.totalorder %v1818, 1
        %vm1831 = vcmp.eq.s32.totalorder %v1819, 1
        %vm1832 = vcmp.eq.s32.totalorder %v1820, 1
        %vm1833 = vcmp.eq.s32.totalorder %v1821, 1
        %vm1834 = vcmp.eq.s32.totalorder %v1822, 1
        %vm1835 = vcmp.eq.s32.totalorder %v1823, 1
        %vm1836 = vcmp.eq.s32.totalorder %v1824, 1
        %vm1837 = vcmp.eq.s32.totalorder %v1825, 1
        %v1838 = vsel %vm1826, %v1743, 0.0
        %v1839 = vsel %vm1827, %v1744, 0.0
        %v1840 = vsel %vm1828, %v1745, 0.0
        %v1841 = vsel %vm1829, %v1746, 0.0
        %v1842 = vsel %vm1830, %v1747, 0.0
        %v1843 = vsel %vm1831, %v1748, 0.0
        %v1844 = vsel %vm1832, %v1749, 0.0
        %v1845 = vsel %vm1833, %v1750, 0.0
        %v1846 = vsel %vm1834, %v1751, 0.0
        %v1847 = vsel %vm1835, %v1752, 0.0
        %v1848 = vsel %vm1836, %v1753, 0.0
        %v1849 = vsel %vm1837, %v1754, 0.0
        %v1850 = vpack.c.bf16 %v1839, %v1838
        %v1851 = vpack.c.bf16 %v1841, %v1840
        %v1852 = vpack.c.bf16 %v1843, %v1842
        %v1853 = vpack.c.bf16 %v1845, %v1844
        %v1854 = vpack.c.bf16 %v1847, %v1846
        %v1855 = vpack.c.bf16 %v1849, %v1848
        %v1856 = vld [vmem:[#allocation10] sm:$0xf]
        %s1857 = scalar_lea.vmem [#allocation10], 12
        %v1858 = vld [vmem:[%s1857] sm:$0xf]
        %v1863 = vunpack.c.l.b16 %v1851
        %v1864 = vunpack.c.l.b16 %v1852
        %v1865 = vunpack.c.l.b16 %v1853
        %v1866 = vunpack.c.l.b16 %v1854
        %v1867 = vpack.c.b16 %v1864, %v1863
        %v1868 = vpack.c.b16 %v1866, %v1865
        %vm1869 = vcmask 64512
        %v1871 = vsel %vm1869, %v1867, 0
        %v1874 = vsel %vm1869, %v1868, 0
        %vm1876 = vcmask 1043456
        %v1878 = vsel %vm1876, %v1858, 0
        %1880 = vmatprep.subr.bf16.mxu0 0
        %1881 = vmatpush1.bf16.msra.mxu0 %v1878
        %1882 = vmatprep.subr.bf16.mxu0 0
        %1883 = vmatpush1.bf16.msra.mxu0 0
        %1884 = vmatprep.subr.bf16.mxu0 0
        %1885 = vmatpush1.bf16.msra.mxu0 0
        %1886 = vmatprep.subr.bf16.mxu0 0
        %1887 = vmatpush1.bf16.msra.mxu0 0
        %1888 = vmatprep.subr.bf16.mxu0 0
        %1889 = vmatpush1.bf16.msra.mxu0 0
        %1890 = vmatprep.subr.bf16.mxu0 0
        %1891 = vmatpush1.bf16.msra.mxu0 0
        %1892 = vmatprep.subr.bf16.mxu0 0
        %1893 = vmatpush1.bf16.msra.mxu0 0
        %1894 = vmatprep.subr.bf16.mxu0 0
        %1895 = vmatpush1.bf16.msra.mxu0 0
        %1896 = vmatprep.subr.bf16.mxu0 0
        %1897 = vmatpush1.bf16.msra.mxu0 0
        %1898 = vmatprep.subr.bf16.mxu0 0
        %1899 = vmatpush1.bf16.msra.mxu0 0
        %1900 = vmatprep.subr.bf16.mxu0 0
        %1901 = vmatpush1.bf16.msra.mxu0 0
        %1902 = vmatprep.subr.bf16.mxu0 0
        %1903 = vmatpush1.bf16.msra.mxu0 0
        %1904 = vmatprep.subr.bf16.mxu0 0
        %1905 = vmatpush1.bf16.msra.mxu0 0
        %1906 = vmatprep.subr.bf16.mxu0 0
        %1907 = vmatpush1.bf16.msra.mxu0 0
        %1908 = vmatprep.subr.bf16.mxu0 0
        %1909 = vmatpush1.bf16.msra.mxu0 0
        %1910 = vmatprep.subr.bf16.mxu0 0
        %1911 = vmatpush1.bf16.msra.mxu0 0
        %1912 = vmatprep.mubr.bf16.mxu0 0
        %1913 = vmatmul.mubr.bf16.gmra.mrb[0].mxu0 %v1871
        %v1914 = vpop.f32.mrb[0].mxu0
        %v1915 = vadd.f32 0.0, %v1914
        %v1916 = vpop.f32.mrb[0].mxu0
        %v1917 = vpop.f32.mrb[0].mxu0
        %v1918 = vadd.f32 0.0, %v1917
        %v1919 = vpop.f32.mrb[0].mxu0
        %1920 = vmatprep.mubr.bf16.mxu0 0
        %1921 = vmatmul.mubr.bf16.gmra.mrb[0].mxu0 %v1874
        %v1922 = vpop.f32.mrb[0].mxu0
        %v1923 = vadd.f32 0.0, %v1922
        %v1924 = vpop.f32.mrb[0].mxu0
        %v1925 = vpop.f32.mrb[0].mxu0
        %v1926 = vadd.f32 0.0, %v1925
        %v1927 = vpop.f32.mrb[0].mxu0
        %1928 = vdwg.mxu0
        %v1930 = vunpack.c.l.b16 %v1850
        %v1931 = vpack.c.b16 %v1863, %v1930
        %v1932 = vpack.c.b16 %v1865, %v1864
        %v1934 = vsel %vm1869, %v1931, 0
        %v1937 = vsel %vm1869, %v1932, 0
        %v1940 = vsel %vm1876, %v1856, 0
        %1942 = vmatprep.subr.bf16.mxu0 0
        %1943 = vmatpush1.bf16.msra.mxu0 %v1940
        %1944 = vmatprep.subr.bf16.mxu0 0
        %1945 = vmatpush1.bf16.msra.mxu0 0
        %1946 = vmatprep.subr.bf16.mxu0 0
        %1947 = vmatpush1.bf16.msra.mxu0 0
        %1948 = vmatprep.subr.bf16.mxu0 0
        %1949 = vmatpush1.bf16.msra.mxu0 0
        %1950 = vmatprep.subr.bf16.mxu0 0
        %1951 = vmatpush1.bf16.msra.mxu0 0
        %1952 = vmatprep.subr.bf16.mxu0 0
        %1953 = vmatpush1.bf16.msra.mxu0 0
        %1954 = vmatprep.subr.bf16.mxu0 0
        %1955 = vmatpush1.bf16.msra.mxu0 0
        %1956 = vmatprep.subr.bf16.mxu0 0
        %1957 = vmatpush1.bf16.msra.mxu0 0
        %1958 = vmatprep.subr.bf16.mxu0 0
        %1959 = vmatpush1.bf16.msra.mxu0 0
        %1960 = vmatprep.subr.bf16.mxu0 0
        %1961 = vmatpush1.bf16.msra.mxu0 0
        %1962 = vmatprep.subr.bf16.mxu0 0
        %1963 = vmatpush1.bf16.msra.mxu0 0
        %1964 = vmatprep.subr.bf16.mxu0 0
        %1965 = vmatpush1.bf16.msra.mxu0 0
        %1966 = vmatprep.subr.bf16.mxu0 0
        %1967 = vmatpush1.bf16.msra.mxu0 0
        %1968 = vmatprep.subr.bf16.mxu0 0
        %1969 = vmatpush1.bf16.msra.mxu0 0
        %1970 = vmatprep.subr.bf16.mxu0 0
        %1971 = vmatpush1.bf16.msra.mxu0 0
        %1972 = vmatprep.subr.bf16.mxu0 0
        %1973 = vmatpush1.bf16.msra.mxu0 0
        %1974 = vmatprep.mubr.bf16.mxu0 0
        %1975 = vmatmul.mubr.bf16.gmra.mrb[0].mxu0 %v1934
        %v1976 = vpop.f32.mrb[0].mxu0
        %v1977 = vadd.f32 %v1915, %v1976
        %v1978 = vpop.f32.mrb[0].mxu0
        %v1979 = vpop.f32.mrb[0].mxu0
        %v1980 = vadd.f32 %v1918, %v1979
        %v1981 = vpop.f32.mrb[0].mxu0
        %1982 = vmatprep.mubr.bf16.mxu0 0
        %1983 = vmatmul.mubr.bf16.gmra.mrb[0].mxu0 %v1937
        %v1984 = vpop.f32.mrb[0].mxu0
        %v1985 = vadd.f32 %v1923, %v1984
        %v1986 = vpop.f32.mrb[0].mxu0
        %v1987 = vpop.f32.mrb[0].mxu0
        %v1988 = vadd.f32 %v1926, %v1987
        %v1989 = vpop.f32.mrb[0].mxu0
        %1990 = vdwg.mxu0
        %s1991 = scalar_lea.vmem [#allocation10], 24
        %v1992 = vld [vmem:[%s1991] sm:$0xf]
        %v1994 = vunpack.c.l.b16 %v1855
        %v1995 = vpack.c.b16 %v1994, %v1866
        %v1997 = vsel %vm1869, %v1995, 0
        %v2000 = vsel %vm1876, %v1992, 0
        %2002 = vmatprep.subr.bf16.mxu0 0
        %2003 = vmatpush1.bf16.msra.mxu0 %v2000
        %2004 = vmatprep.subr.bf16.mxu0 0
        %2005 = vmatpush1.bf16.msra.mxu0 0
        %2006 = vmatprep.subr.bf16.mxu0 0
        %2007 = vmatpush1.bf16.msra.mxu0 0
        %2008 = vmatprep.subr.bf16.mxu0 0
        %2009 = vmatpush1.bf16.msra.mxu0 0
        %2010 = vmatprep.subr.bf16.mxu0 0
        %2011 = vmatpush1.bf16.msra.mxu0 0
        %2012 = vmatprep.subr.bf16.mxu0 0
        %2013 = vmatpush1.bf16.msra.mxu0 0
        %2014 = vmatprep.subr.bf16.mxu0 0
        %2015 = vmatpush1.bf16.msra.mxu0 0
        %2016 = vmatprep.subr.bf16.mxu0 0
        %2017 = vmatpush1.bf16.msra.mxu0 0
        %2018 = vmatprep.subr.bf16.mxu0 0
        %2019 = vmatpush1.bf16.msra.mxu0 0
        %2020 = vmatprep.subr.bf16.mxu0 0
        %2021 = vmatpush1.bf16.msra.mxu0 0
        %2022 = vmatprep.subr.bf16.mxu0 0
        %2023 = vmatpush1.bf16.msra.mxu0 0
        %2024 = vmatprep.subr.bf16.mxu0 0
        %2025 = vmatpush1.bf16.msra.mxu0 0
        %2026 = vmatprep.subr.bf16.mxu0 0
        %2027 = vmatpush1.bf16.msra.mxu0 0
        %2028 = vmatprep.subr.bf16.mxu0 0
        %2029 = vmatpush1.bf16.msra.mxu0 0
        %2030 = vmatprep.subr.bf16.mxu0 0
        %2031 = vmatpush1.bf16.msra.mxu0 0
        %2032 = vmatprep.subr.bf16.mxu0 0
        %2033 = vmatpush1.bf16.msra.mxu0 0
        %2034 = vmatprep.mubr.bf16.mxu0 0
        %2035 = vmatmul.mubr.bf16.gmra.mrb[0].mxu0 %v1937
        %v2036 = vpop.f32.mrb[0].mxu0
        %v2037 = vadd.f32 0.0, %v2036
        %v2038 = vpop.f32.mrb[0].mxu0
        %v2039 = vpop.f32.mrb[0].mxu0
        %v2040 = vadd.f32 0.0, %v2039
        %v2041 = vpop.f32.mrb[0].mxu0
        %2042 = vmatprep.mubr.bf16.mxu0 0
        %2043 = vmatmul.mubr.bf16.gmra.mrb[0].mxu0 %v1997
        %v2044 = vpop.f32.mrb[0].mxu0
        %v2045 = vadd.f32 0.0, %v2044
        %v2046 = vpop.f32.mrb[0].mxu0
        %v2047 = vpop.f32.mrb[0].mxu0
        %v2048 = vadd.f32 0.0, %v2047
        %v2049 = vpop.f32.mrb[0].mxu0
        %2050 = vdwg.mxu0
        %v2051 = vadd.f32 %v1977, %v2037
        %v2052 = vadd.f32 %v1980, %v2040
        %v2053 = vadd.f32 %v1985, %v2045
        %v2054 = vadd.f32 %v1988, %v2048
        %v2055 = vunpack.c.h.b16 %v1850
        %v2056 = vunpack.c.h.b16 %v1851
        %v2057 = vunpack.c.h.b16 %v1852
        %v2058 = vunpack.c.h.b16 %v1853
        %v2059 = vpack.c.b16 %v1930, %v1930
        %v2060 = vpack.c.b16 %v2055, %v2055
        %v2061 = vpack.c.b16 %v1863, %v1863
        %v2062 = vpack.c.b16 %v2056, %v2056
        %v2063 = vpack.c.b16 %v1864, %v1864
        %v2064 = vpack.c.b16 %v2057, %v2057
        %v2065 = vpack.c.b16 %v1865, %v1865
        %v2066 = vpack.c.b16 %v2058, %v2058
        %v2068 = vshrl.u32 %v2059, 16
        %v2070 = vrot.slane %v2068, 4
        %v2071 = vshll.u32 %v2059, 16
        %v2073 = vrot.slane %v2071, 5
        %v2074 = vor.u32 %v2070, %v2073
        %v2075 = vrot.slane %v2074, 4
        %v2077 = vshll.u32 %v2060, 16
        %v2079 = vrot.slane %v2077, 5
        %v2080 = vsel %vm761, %v2075, %v2079
        %v2082 = vshrl.u32 %v2061, 16
        %v2084 = vrot.slane %v2082, 4
        %v2085 = vshll.u32 %v2061, 16
        %v2087 = vrot.slane %v2085, 5
        %v2088 = vor.u32 %v2084, %v2087
        %v2089 = vrot.slane %v2088, 4
        %v2091 = vshll.u32 %v2062, 16
        %v2093 = vrot.slane %v2091, 5
        %v2094 = vsel %vm761, %v2089, %v2093
        %v2096 = vshrl.u32 %v2063, 16
        %v2098 = vrot.slane %v2096, 4
        %v2099 = vshll.u32 %v2063, 16
        %v2101 = vrot.slane %v2099, 5
        %v2102 = vor.u32 %v2098, %v2101
        %v2103 = vrot.slane %v2102, 4
        %v2105 = vshll.u32 %v2064, 16
        %v2107 = vrot.slane %v2105, 5
        %v2108 = vsel %vm761, %v2103, %v2107
        %v2110 = vshrl.u32 %v2065, 16
        %v2112 = vrot.slane %v2110, 4
        %v2113 = vshll.u32 %v2065, 16
        %v2115 = vrot.slane %v2113, 5
        %v2116 = vor.u32 %v2112, %v2115
        %v2117 = vrot.slane %v2116, 4
        %v2119 = vshll.u32 %v2066, 16
        %v2121 = vrot.slane %v2119, 5
        %v2122 = vsel %vm761, %v2117, %v2121
        %s2123 = scalar_lea.vmem [#allocation10], 4
        %v2124 = vld [vmem:[%s2123] sm:$0xf]
        %v2125 = vunpack.c.l.b16 %v2080
        %v2126 = vunpack.c.l.b16 %v2094
        %v2127 = vunpack.c.l.b16 %v2108
        %v2128 = vunpack.c.l.b16 %v2122
        %v2129 = vpack.c.b16 %v2126, %v2125
        %v2130 = vpack.c.b16 %v2128, %v2127
        %v2132 = vsel %vm1869, %v2129, 0
        %v2135 = vsel %vm1869, %v2130, 0
        %v2138 = vsel %vm1876, %v2124, 0
        %2140 = vmatprep.subr.bf16.mxu0 0
        %2141 = vmatpush1.bf16.msra.mxu0 %v2138
        %2142 = vmatprep.subr.bf16.mxu0 0
        %2143 = vmatpush1.bf16.msra.mxu0 0
        %2144 = vmatprep.subr.bf16.mxu0 0
        %2145 = vmatpush1.bf16.msra.mxu0 0
        %2146 = vmatprep.subr.bf16.mxu0 0
        %2147 = vmatpush1.bf16.msra.mxu0 0
        %2148 = vmatprep.subr.bf16.mxu0 0
        %2149 = vmatpush1.bf16.msra.mxu0 0
        %2150 = vmatprep.subr.bf16.mxu0 0
        %2151 = vmatpush1.bf16.msra.mxu0 0
        %2152 = vmatprep.subr.bf16.mxu0 0
        %2153 = vmatpush1.bf16.msra.mxu0 0
        %2154 = vmatprep.subr.bf16.mxu0 0
        %2155 = vmatpush1.bf16.msra.mxu0 0
        %2156 = vmatprep.subr.bf16.mxu0 0
        %2157 = vmatpush1.bf16.msra.mxu0 0
        %2158 = vmatprep.subr.bf16.mxu0 0
        %2159 = vmatpush1.bf16.msra.mxu0 0
        %2160 = vmatprep.subr.bf16.mxu0 0
        %2161 = vmatpush1.bf16.msra.mxu0 0
        %2162 = vmatprep.subr.bf16.mxu0 0
        %2163 = vmatpush1.bf16.msra.mxu0 0
        %2164 = vmatprep.subr.bf16.mxu0 0
        %2165 = vmatpush1.bf16.msra.mxu0 0
        %2166 = vmatprep.subr.bf16.mxu0 0
        %2167 = vmatpush1.bf16.msra.mxu0 0
        %2168 = vmatprep.subr.bf16.mxu0 0
        %2169 = vmatpush1.bf16.msra.mxu0 0
        %2170 = vmatprep.subr.bf16.mxu0 0
        %2171 = vmatpush1.bf16.msra.mxu0 0
        %2172 = vmatprep.mubr.bf16.mxu0 0
        %2173 = vmatmul.mubr.bf16.gmra.mrb[0].mxu0 %v2132
        %v2174 = vpop.f32.mrb[0].mxu0
        %v2175 = vadd.f32 0.0, %v2174
        %v2176 = vpop.f32.mrb[0].mxu0
        %v2177 = vpop.f32.mrb[0].mxu0
        %v2178 = vadd.f32 0.0, %v2177
        %v2179 = vpop.f32.mrb[0].mxu0
        %2180 = vmatprep.mubr.bf16.mxu0 0
        %2181 = vmatmul.mubr.bf16.gmra.mrb[0].mxu0 %v2135
        %v2182 = vpop.f32.mrb[0].mxu0
        %v2183 = vadd.f32 0.0, %v2182
        %v2184 = vpop.f32.mrb[0].mxu0
        %v2185 = vpop.f32.mrb[0].mxu0
        %v2186 = vadd.f32 0.0, %v2185
        %v2187 = vpop.f32.mrb[0].mxu0
        %2188 = vdwg.mxu0
        %v2189 = vadd.f32 %v2051, %v2175
        %v2190 = vadd.f32 %v2052, %v2178
        %v2191 = vadd.f32 %v2053, %v2183
        %v2192 = vadd.f32 %v2054, %v2186
        %v2193 = vunpack.c.h.b16 %v1854
        %v2194 = vpack.c.b16 %v1866, %v1866
        %v2195 = vpack.c.b16 %v2193, %v2193
        %v2197 = vshrl.u32 %v2194, 16
        %v2199 = vrot.slane %v2197, 4
        %v2200 = vshll.u32 %v2194, 16
        %v2202 = vrot.slane %v2200, 5
        %v2203 = vor.u32 %v2199, %v2202
        %v2204 = vrot.slane %v2203, 4
        %v2206 = vshll.u32 %v2195, 16
        %v2208 = vrot.slane %v2206, 5
        %v2209 = vsel %vm761, %v2204, %v2208
        %s2210 = scalar_lea.vmem [#allocation10], 16
        %v2211 = vld [vmem:[%s2210] sm:$0xf]
        %v2212 = vunpack.c.l.b16 %v2209
        %v2213 = vpack.c.b16 %v2127, %v2126
        %v2214 = vpack.c.b16 %v2212, %v2128
        %v2216 = vsel %vm1869, %v2213, 0
        %v2219 = vsel %vm1869, %v2214, 0
        %v2222 = vsel %vm1876, %v2211, 0
        %2224 = vmatprep.subr.bf16.mxu0 0
        %2225 = vmatpush1.bf16.msra.mxu0 %v2222
        %2226 = vmatprep.subr.bf16.mxu0 0
        %2227 = vmatpush1.bf16.msra.mxu0 0
        %2228 = vmatprep.subr.bf16.mxu0 0
        %2229 = vmatpush1.bf16.msra.mxu0 0
        %2230 = vmatprep.subr.bf16.mxu0 0
        %2231 = vmatpush1.bf16.msra.mxu0 0
        %2232 = vmatprep.subr.bf16.mxu0 0
        %2233 = vmatpush1.bf16.msra.mxu0 0
        %2234 = vmatprep.subr.bf16.mxu0 0
        %2235 = vmatpush1.bf16.msra.mxu0 0
        %2236 = vmatprep.subr.bf16.mxu0 0
        %2237 = vmatpush1.bf16.msra.mxu0 0
        %2238 = vmatprep.subr.bf16.mxu0 0
        %2239 = vmatpush1.bf16.msra.mxu0 0
        %2240 = vmatprep.subr.bf16.mxu0 0
        %2241 = vmatpush1.bf16.msra.mxu0 0
        %2242 = vmatprep.subr.bf16.mxu0 0
        %2243 = vmatpush1.bf16.msra.mxu0 0
        %2244 = vmatprep.subr.bf16.mxu0 0
        %2245 = vmatpush1.bf16.msra.mxu0 0
        %2246 = vmatprep.subr.bf16.mxu0 0
        %2247 = vmatpush1.bf16.msra.mxu0 0
        %2248 = vmatprep.subr.bf16.mxu0 0
        %2249 = vmatpush1.bf16.msra.mxu0 0
        %2250 = vmatprep.subr.bf16.mxu0 0
        %2251 = vmatpush1.bf16.msra.mxu0 0
        %2252 = vmatprep.subr.bf16.mxu0 0
        %2253 = vmatpush1.bf16.msra.mxu0 0
        %2254 = vmatprep.subr.bf16.mxu0 0
        %2255 = vmatpush1.bf16.msra.mxu0 0
        %2256 = vmatprep.mubr.bf16.mxu0 0
        %2257 = vmatmul.mubr.bf16.gmra.mrb[0].mxu0 %v2216
        %v2258 = vpop.f32.mrb[0].mxu0
        %v2259 = vadd.f32 0.0, %v2258
        %v2260 = vpop.f32.mrb[0].mxu0
        %v2261 = vpop.f32.mrb[0].mxu0
        %v2262 = vadd.f32 0.0, %v2261
        %v2263 = vpop.f32.mrb[0].mxu0
        %2264 = vmatprep.mubr.bf16.mxu0 0
        %2265 = vmatmul.mubr.bf16.gmra.mrb[0].mxu0 %v2219
        %v2266 = vpop.f32.mrb[0].mxu0
        %v2267 = vadd.f32 0.0, %v2266
        %v2268 = vpop.f32.mrb[0].mxu0
        %v2269 = vpop.f32.mrb[0].mxu0
        %v2270 = vadd.f32 0.0, %v2269
        %v2271 = vpop.f32.mrb[0].mxu0
        %2272 = vdwg.mxu0
        %v2273 = vadd.f32 %v2189, %v2259
        %v2274 = vadd.f32 %v2190, %v2262
        %v2275 = vadd.f32 %v2191, %v2267
        %v2276 = vadd.f32 %v2192, %v2270
        %v2277 = vunpack.c.h.b16 %v1855
        %v2278 = vpack.c.b16 %v1994, %v1994
        %v2279 = vpack.c.b16 %v2277, %v2277
        %v2281 = vshrl.u32 %v2278, 16
        %v2283 = vrot.slane %v2281, 4
        %v2284 = vshll.u32 %v2278, 16
        %v2286 = vrot.slane %v2284, 5
        %v2287 = vor.u32 %v2283, %v2286
        %v2288 = vrot.slane %v2287, 4
        %v2290 = vshll.u32 %v2279, 16
        %v2292 = vrot.slane %v2290, 5
        %v2293 = vsel %vm761, %v2288, %v2292
        %s2294 = scalar_lea.vmem [#allocation10], 28
        %v2295 = vld [vmem:[%s2294] sm:$0xf]
        %v2296 = vunpack.c.l.b16 %v2293
        %v2297 = vpack.c.b16 %v2296, %v2212
        %v2299 = vsel %vm1869, %v2297, 0
        %v2302 = vsel %vm1876, %v2295, 0
        %2304 = vmatprep.subr.bf16.mxu0 0
        %2305 = vmatpush1.bf16.msra.mxu0 %v2302
        %2306 = vmatprep.subr.bf16.mxu0 0
        %2307 = vmatpush1.bf16.msra.mxu0 0
        %2308 = vmatprep.subr.bf16.mxu0 0
        %2309 = vmatpush1.bf16.msra.mxu0 0
        %2310 = vmatprep.subr.bf16.mxu0 0
        %2311 = vmatpush1.bf16.msra.mxu0 0
        %2312 = vmatprep.subr.bf16.mxu0 0
        %2313 = vmatpush1.bf16.msra.mxu0 0
        %2314 = vmatprep.subr.bf16.mxu0 0
        %2315 = vmatpush1.bf16.msra.mxu0 0
        %2316 = vmatprep.subr.bf16.mxu0 0
        %2317 = vmatpush1.bf16.msra.mxu0 0
        %2318 = vmatprep.subr.bf16.mxu0 0
        %2319 = vmatpush1.bf16.msra.mxu0 0
        %2320 = vmatprep.subr.bf16.mxu0 0
        %2321 = vmatpush1.bf16.msra.mxu0 0
        %2322 = vmatprep.subr.bf16.mxu0 0
        %2323 = vmatpush1.bf16.msra.mxu0 0
        %2324 = vmatprep.subr.bf16.mxu0 0
        %2325 = vmatpush1.bf16.msra.mxu0 0
        %2326 = vmatprep.subr.bf16.mxu0 0
        %2327 = vmatpush1.bf16.msra.mxu0 0
        %2328 = vmatprep.subr.bf16.mxu0 0
        %2329 = vmatpush1.bf16.msra.mxu0 0
        %2330 = vmatprep.subr.bf16.mxu0 0
        %2331 = vmatpush1.bf16.msra.mxu0 0
        %2332 = vmatprep.subr.bf16.mxu0 0
        %2333 = vmatpush1.bf16.msra.mxu0 0
        %2334 = vmatprep.subr.bf16.mxu0 0
        %2335 = vmatpush1.bf16.msra.mxu0 0
        %2336 = vmatprep.mubr.bf16.mxu0 0
        %2337 = vmatmul.mubr.bf16.gmra.mrb[0].mxu0 %v2135
        %v2338 = vpop.f32.mrb[0].mxu0
        %v2339 = vadd.f32 0.0, %v2338
        %v2340 = vpop.f32.mrb[0].mxu0
        %v2341 = vpop.f32.mrb[0].mxu0
        %v2342 = vadd.f32 0.0, %v2341
        %v2343 = vpop.f32.mrb[0].mxu0
        %2344 = vmatprep.mubr.bf16.mxu0 0
        %2345 = vmatmul.mubr.bf16.gmra.mrb[0].mxu0 %v2299
        %v2346 = vpop.f32.mrb[0].mxu0
        %v2347 = vadd.f32 0.0, %v2346
        %v2348 = vpop.f32.mrb[0].mxu0
        %v2349 = vpop.f32.mrb[0].mxu0
        %v2350 = vadd.f32 0.0, %v2349
        %v2351 = vpop.f32.mrb[0].mxu0
        %2352 = vdwg.mxu0
        %v2353 = vadd.f32 %v2273, %v2339
        %v2354 = vadd.f32 %v2274, %v2342
        %v2355 = vadd.f32 %v2275, %v2347
        %v2356 = vadd.f32 %v2276, %v2350
        %v2357 = vrot.slane %v2059, 5
        %v2358 = vrot.slane %v2357, 4
        %v2359 = vrot.slane %v2060, 5
        %v2360 = vsel %vm1304, %v2358, %v2359
        %v2361 = vrot.slane %v2061, 5
        %v2362 = vrot.slane %v2361, 4
        %v2363 = vrot.slane %v2062, 5
        %v2364 = vsel %vm1304, %v2362, %v2363
        %v2365 = vrot.slane %v2063, 5
        %v2366 = vrot.slane %v2365, 4
        %v2367 = vrot.slane %v2064, 5
        %v2368 = vsel %vm1304, %v2366, %v2367
        %v2369 = vrot.slane %v2065, 5
        %v2370 = vrot.slane %v2369, 4
        %v2371 = vrot.slane %v2066, 5
        %v2372 = vsel %vm1304, %v2370, %v2371
        %s2373 = scalar_lea.vmem [#allocation10], 8
        %v2374 = vld [vmem:[%s2373] sm:$0xf]
        %v2375 = vunpack.c.l.b16 %v2360
        %v2376 = vunpack.c.l.b16 %v2364
        %v2377 = vunpack.c.l.b16 %v2368
        %v2378 = vunpack.c.l.b16 %v2372
        %v2379 = vpack.c.b16 %v2376, %v2375
        %v2380 = vpack.c.b16 %v2378, %v2377
        %v2382 = vsel %vm1869, %v2379, 0
        %v2385 = vsel %vm1869, %v2380, 0
        %v2388 = vsel %vm1876, %v2374, 0
        %2390 = vmatprep.subr.bf16.mxu0 0
        %2391 = vmatpush1.bf16.msra.mxu0 %v2388
        %2392 = vmatprep.subr.bf16.mxu0 0
        %2393 = vmatpush1.bf16.msra.mxu0 0
        %2394 = vmatprep.subr.bf16.mxu0 0
        %2395 = vmatpush1.bf16.msra.mxu0 0
        %2396 = vmatprep.subr.bf16.mxu0 0
        %2397 = vmatpush1.bf16.msra.mxu0 0
        %2398 = vmatprep.subr.bf16.mxu0 0
        %2399 = vmatpush1.bf16.msra.mxu0 0
        %2400 = vmatprep.subr.bf16.mxu0 0
        %2401 = vmatpush1.bf16.msra.mxu0 0
        %2402 = vmatprep.subr.bf16.mxu0 0
        %2403 = vmatpush1.bf16.msra.mxu0 0
        %2404 = vmatprep.subr.bf16.mxu0 0
        %2405 = vmatpush1.bf16.msra.mxu0 0
        %2406 = vmatprep.subr.bf16.mxu0 0
        %2407 = vmatpush1.bf16.msra.mxu0 0
        %2408 = vmatprep.subr.bf16.mxu0 0
        %2409 = vmatpush1.bf16.msra.mxu0 0
        %2410 = vmatprep.subr.bf16.mxu0 0
        %2411 = vmatpush1.bf16.msra.mxu0 0
        %2412 = vmatprep.subr.bf16.mxu0 0
        %2413 = vmatpush1.bf16.msra.mxu0 0
        %2414 = vmatprep.subr.bf16.mxu0 0
        %2415 = vmatpush1.bf16.msra.mxu0 0
        %2416 = vmatprep.subr.bf16.mxu0 0
        %2417 = vmatpush1.bf16.msra.mxu0 0
        %2418 = vmatprep.subr.bf16.mxu0 0
        %2419 = vmatpush1.bf16.msra.mxu0 0
        %2420 = vmatprep.subr.bf16.mxu0 0
        %2421 = vmatpush1.bf16.msra.mxu0 0
        %2422 = vmatprep.mubr.bf16.mxu0 0
        %2423 = vmatmul.mubr.bf16.gmra.mrb[0].mxu0 %v2382
        %v2424 = vpop.f32.mrb[0].mxu0
        %v2425 = vadd.f32 0.0, %v2424
        %v2426 = vpop.f32.mrb[0].mxu0
        %v2427 = vpop.f32.mrb[0].mxu0
        %v2428 = vadd.f32 0.0, %v2427
        %v2429 = vpop.f32.mrb[0].mxu0
        %2430 = vmatprep.mubr.bf16.mxu0 0
        %2431 = vmatmul.mubr.bf16.gmra.mrb[0].mxu0 %v2385
        %v2432 = vpop.f32.mrb[0].mxu0
        %v2433 = vadd.f32 0.0, %v2432
        %v2434 = vpop.f32.mrb[0].mxu0
        %v2435 = vpop.f32.mrb[0].mxu0
        %v2436 = vadd.f32 0.0, %v2435
        %v2437 = vpop.f32.mrb[0].mxu0
        %2438 = vdwg.mxu0
        %v2439 = vadd.f32 %v2353, %v2425
        %v2440 = vadd.f32 %v2354, %v2428
        %v2441 = vadd.f32 %v2355, %v2433
        %v2442 = vadd.f32 %v2356, %v2436
        %v2443 = vrot.slane %v2194, 5
        %v2444 = vrot.slane %v2443, 4
        %v2445 = vrot.slane %v2195, 5
        %v2446 = vsel %vm1304, %v2444, %v2445
        %s2447 = scalar_lea.vmem [#allocation10], 20
        %v2448 = vld [vmem:[%s2447] sm:$0xf]
        %v2449 = vunpack.c.l.b16 %v2446
        %v2450 = vpack.c.b16 %v2377, %v2376
        %v2451 = vpack.c.b16 %v2449, %v2378
        %v2453 = vsel %vm1869, %v2450, 0
        %v2456 = vsel %vm1869, %v2451, 0
        %v2459 = vsel %vm1876, %v2448, 0
        %2461 = vmatprep.subr.bf16.mxu0 0
        %2462 = vmatpush1.bf16.msra.mxu0 %v2459
        %2463 = vmatprep.subr.bf16.mxu0 0
        %2464 = vmatpush1.bf16.msra.mxu0 0
        %2465 = vmatprep.subr.bf16.mxu0 0
        %2466 = vmatpush1.bf16.msra.mxu0 0
        %2467 = vmatprep.subr.bf16.mxu0 0
        %2468 = vmatpush1.bf16.msra.mxu0 0
        %2469 = vmatprep.subr.bf16.mxu0 0
        %2470 = vmatpush1.bf16.msra.mxu0 0
        %2471 = vmatprep.subr.bf16.mxu0 0
        %2472 = vmatpush1.bf16.msra.mxu0 0
        %2473 = vmatprep.subr.bf16.mxu0 0
        %2474 = vmatpush1.bf16.msra.mxu0 0
        %2475 = vmatprep.subr.bf16.mxu0 0
        %2476 = vmatpush1.bf16.msra.mxu0 0
        %2477 = vmatprep.subr.bf16.mxu0 0
        %2478 = vmatpush1.bf16.msra.mxu0 0
        %2479 = vmatprep.subr.bf16.mxu0 0
        %2480 = vmatpush1.bf16.msra.mxu0 0
        %2481 = vmatprep.subr.bf16.mxu0 0
        %2482 = vmatpush1.bf16.msra.mxu0 0
        %2483 = vmatprep.subr.bf16.mxu0 0
        %2484 = vmatpush1.bf16.msra.mxu0 0
        %2485 = vmatprep.subr.bf16.mxu0 0
        %2486 = vmatpush1.bf16.msra.mxu0 0
        %2487 = vmatprep.subr.bf16.mxu0 0
        %2488 = vmatpush1.bf16.msra.mxu0 0
        %2489 = vmatprep.subr.bf16.mxu0 0
        %2490 = vmatpush1.bf16.msra.mxu0 0
        %2491 = vmatprep.subr.bf16.mxu0 0
        %2492 = vmatpush1.bf16.msra.mxu0 0
        %2493 = vmatprep.mubr.bf16.mxu0 0
        %2494 = vmatmul.mubr.bf16.gmra.mrb[0].mxu0 %v2453
        %v2495 = vpop.f32.mrb[0].mxu0
        %v2496 = vadd.f32 0.0, %v2495
        %v2497 = vpop.f32.mrb[0].mxu0
        %v2498 = vpop.f32.mrb[0].mxu0
        %v2499 = vadd.f32 0.0, %v2498
        %v2500 = vpop.f32.mrb[0].mxu0
        %2501 = vmatprep.mubr.bf16.mxu0 0
        %2502 = vmatmul.mubr.bf16.gmra.mrb[0].mxu0 %v2456
        %v2503 = vpop.f32.mrb[0].mxu0
        %v2504 = vadd.f32 0.0, %v2503
        %v2505 = vpop.f32.mrb[0].mxu0
        %v2506 = vpop.f32.mrb[0].mxu0
        %v2507 = vadd.f32 0.0, %v2506
        %v2508 = vpop.f32.mrb[0].mxu0
        %2509 = vdwg.mxu0
        %v2510 = vadd.f32 %v2439, %v2496
        %v2511 = vadd.f32 %v2440, %v2499
        %v2512 = vadd.f32 %v2441, %v2504
        %v2513 = vadd.f32 %v2442, %v2507
        %v2514 = vrot.slane %v2278, 5
        %v2515 = vrot.slane %v2514, 4
        %v2516 = vrot.slane %v2279, 5
        %v2517 = vsel %vm1304, %v2515, %v2516
        %s2518 = scalar_lea.vmem [#allocation10], 32
        %v2519 = vld [vmem:[%s2518] sm:$0xf]
        %v2520 = vunpack.c.l.b16 %v2517
        %v2521 = vpack.c.b16 %v2520, %v2449
        %v2523 = vsel %vm1869, %v2521, 0
        %v2526 = vsel %vm1876, %v2519, 0
        %2528 = vmatprep.subr.bf16.mxu0 0
        %2529 = vmatpush1.bf16.msra.mxu0 %v2526
        %2530 = vmatprep.subr.bf16.mxu0 0
        %2531 = vmatpush1.bf16.msra.mxu0 0
        %2532 = vmatprep.subr.bf16.mxu0 0
        %2533 = vmatpush1.bf16.msra.mxu0 0
        %2534 = vmatprep.subr.bf16.mxu0 0
        %2535 = vmatpush1.bf16.msra.mxu0 0
        %2536 = vmatprep.subr.bf16.mxu0 0
        %2537 = vmatpush1.bf16.msra.mxu0 0
        %2538 = vmatprep.subr.bf16.mxu0 0
        %2539 = vmatpush1.bf16.msra.mxu0 0
        %2540 = vmatprep.subr.bf16.mxu0 0
        %2541 = vmatpush1.bf16.msra.mxu0 0
        %2542 = vmatprep.subr.bf16.mxu0 0
        %2543 = vmatpush1.bf16.msra.mxu0 0
        %2544 = vmatprep.subr.bf16.mxu0 0
        %2545 = vmatpush1.bf16.msra.mxu0 0
        %2546 = vmatprep.subr.bf16.mxu0 0
        %2547 = vmatpush1.bf16.msra.mxu0 0
        %2548 = vmatprep.subr.bf16.mxu0 0
        %2549 = vmatpush1.bf16.msra.mxu0 0
        %2550 = vmatprep.subr.bf16.mxu0 0
        %2551 = vmatpush1.bf16.msra.mxu0 0
        %2552 = vmatprep.subr.bf16.mxu0 0
        %2553 = vmatpush1.bf16.msra.mxu0 0
        %2554 = vmatprep.subr.bf16.mxu0 0
        %2555 = vmatpush1.bf16.msra.mxu0 0
        %2556 = vmatprep.subr.bf16.mxu0 0
        %2557 = vmatpush1.bf16.msra.mxu0 0
        %2558 = vmatprep.subr.bf16.mxu0 0
        %2559 = vmatpush1.bf16.msra.mxu0 0
        %2560 = vmatprep.mubr.bf16.mxu0 0
        %2561 = vmatmul.mubr.bf16.gmra.mrb[0].mxu0 %v2385
        %v2562 = vpop.f32.mrb[0].mxu0
        %v2563 = vadd.f32 0.0, %v2562
        %v2564 = vpop.f32.mrb[0].mxu0
        %v2565 = vpop.f32.mrb[0].mxu0
        %v2566 = vadd.f32 0.0, %v2565
        %v2567 = vpop.f32.mrb[0].mxu0
        %2568 = vmatprep.mubr.bf16.mxu0 0
        %2569 = vmatmul.mubr.bf16.gmra.mrb[0].mxu0 %v2523
        %v2570 = vpop.f32.mrb[0].mxu0
        %v2571 = vadd.f32 0.0, %v2570
        %v2572 = vpop.f32.mrb[0].mxu0
        %v2573 = vpop.f32.mrb[0].mxu0
        %v2574 = vadd.f32 0.0, %v2573
        %v2575 = vpop.f32.mrb[0].mxu0
        %2576 = vdwg.mxu0
        %v2577 = vadd.f32 %v2510, %v2563
        %v2578 = vadd.f32 %v2511, %v2566
        %v2579 = vadd.f32 %v2512, %v2571
        %v2580 = vadd.f32 %v2513, %v2574
        %v2581 = vld [vmem:[#allocation11] sm:$0x1]
        %v2583 = vlaneseq
        %v2584 = vshrl.u32 %v2583, 7
        %v2585 = vsub.s32 0, %v2584
        %v2586 = vrot.slane %v2581, %v2585
        %v2588 = vmul.f32 %v2577, %v2586
        %v2589 = vmul.f32 %v2578, %v2586
        %v2590 = vmul.f32 %v2579, %v2586
        %v2591 = vmul.f32 %v2580, %v2586
        %v2592 = vld [vmem:[#allocation13] sm:$0x1]
        %v2594 = vlaneseq
        %v2595 = vshrl.u32 %v2594, 7
        %v2596 = vsub.s32 0, %v2595
        %v2597 = vrot.slane %v2592, %v2596
        %v2599 = vadd.f32 %v2588, %v2597
        %v2600 = vadd.f32 %v2589, %v2597
        %v2601 = vadd.f32 %v2590, %v2597
        %v2602 = vadd.f32 %v2591, %v2597
        %v2603 = vmax.f32 %v2599, 0.0
        %v2604 = vmax.f32 %v2600, 0.0
        %v2605 = vmax.f32 %v2601, 0.0
        %v2606 = vmax.f32 %v2602, 0.0
        %v2607 = vpack.c.bf16 %v2603, %v2603
        %v2608 = vpack.c.bf16 %v2604, %v2604
        %v2609 = vpack.c.bf16 %v2605, %v2605
        %v2610 = vpack.c.bf16 %v2606, %v2606
        %2611 = vst [vmem:[%s395] sm:$0xf] %v2607
        %2612 = vst [vmem:[%s395 + $0x4] sm:$0xf] %v2608
        %2613 = vst [vmem:[%s395 + $0x8] sm:$0xf] %v2609
        %2614 = vst [vmem:[%s395 + $0xc] sm:$0xf] %v2610
        %s2615 = sand.u32 %s205, 1
        %s2616 = scalar_lea.sflag [#allocation4], %s2615
        %s2617 = sand.u32 %s205, 1
        %s2618 = smul.addr %s2617, 16
        %s2619 = scalar_lea.vmem [#allocation14], %s2618
        // Predicated region
        $region77: #{tpu_custom_call.1} parent=47 // pred_check
          %p2620 = pneg %p215
        $region78: #{tpu_custom_call.1} parent=47 // pred_check_branch
          %2622 = sbr.rel (%p2620) target = $region80
        $region79: #{tpu_custom_call.1} parent=47 // pred_region
          %s2623 = smul.u32 4, %s32
          %s2625 = ssub.s32 256, 256
          %2626 = vsyncadd %s2616, %s2625
          %s2627 = smul.addr %s31, 8
          %s2628 = sadd.s32 %s2623, %s2627
          %s2629 = smul.addr %s2628, 64
          %s2630 = scalar_lea.hbm %s7, %s2629
          %s2631 = sshll.u32 %s2619, 4
          %s2632 = int_to_ptr.vmem [resolvable:$true] %s2631
          %2637 = dma.vmem_to_hbm [thread:$0]  %s2632, 256, %s2630, %s2616, 64, 64, 4
        $region80: #{tpu_custom_call.1} parent=47 // pred_fallthru
          _
      $region48: #{tpu_custom_call.1} parent=5 // pred_fallthru
        _
      %p2638 = scmp.le.s32.totalorder 2, %s22
      // Predicated region
      $region81: #{tpu_custom_call.1} parent=5 // pred_check
        %p2639 = pneg %p2638
      $region82: #{tpu_custom_call.1} parent=5 // pred_check_branch
        %2641 = sbr.rel (%p2639) target = $region84
      $region83: #{tpu_custom_call.1} parent=5 // pred_region
        %s2642 = ssub.s32 %s22, 2
        // Predicated region
        $region85: #{tpu_custom_call.1} parent=83 // pred_check
          %p2643 = pneg %p221
        $region86: #{tpu_custom_call.1} parent=83 // pred_check_branch
          %2645 = sbr.rel (%p2643) target = $region88
        $region87: #{tpu_custom_call.1} parent=83 // pred_region
          %s2646 = sand.u32 %s206, 1
          %s2647 = scalar_lea.sflag [#allocation4], %s2646
          %s2648 = sand.u32 %s206, 1
          %s2649 = smul.addr %s2648, 16
          %s2650 = scalar_lea.vmem [#allocation14], %s2649
          %2651 = dma.done %s2647, 256
        $region88: #{tpu_custom_call.1} parent=83 // pred_fallthru
          _
      $region84: #{tpu_custom_call.1} parent=5 // pred_fallthru
        _
    $region6: #{tpu_custom_call.1} parent=1 // loop_footer
      %s26 = sadd.s32 1, %s22
    $region7: #{tpu_custom_call.1} parent=1 // loop_footer_branch
      %21 = sbr.rel target = $region3
    $region8: #{tpu_custom_call.1} parent=1 // loop_exit
      _
    %2652 = vsyncpa [#allocation3], 1
    %s2653 = scalar_lea.sflag [#allocation3], 1
    %2654 = vsyncpa %s2653, 1
    %2655 = vsyncpa [#allocation6], 1
    %2656 = vsyncpa [#allocation9], 1
    %2657 = vsyncpa [#allocation12], 1
    %2658 = vsyncpa [#allocation4], 1
    %s2659 = scalar_lea.sflag [#allocation4], 1
    %2660 = vsyncpa %s2659, 1

</llo_original>
